<compile_context>
chip_gen: v6e
topology: v6e:2x2x1
jax: 0.10.0
libtpu: 0.0.40
codegen_flags: <defaults>
</compile_context>

<pallas_src>
import jax
import jax.numpy as jnp
import numpy as np
from jax import lax
from jax.experimental import pallas as pl
from jax.experimental.pallas import tpu as pltpu


class VoiceRange:
    def __init__(self, low, high):
        self.low = low
        self.high = high

    def range_and_silence_length(self):
        # pitches in [low, high] plus one "silence" token
        return self.high - self.low + 1 + 1


BATCH_SIZE = 4
SEQUENCE_LENGTH = 8          # small; original module uses 64
HIDDEN = 200
VOICE_RANGES = {
    'soprano': VoiceRange(61 - 5, 81 + 6),
    'alto':    VoiceRange(56 - 5, 76 + 6),
    'tenor':   VoiceRange(51 - 5, 71 + 6),
    'bass':    VoiceRange(36 - 5, 63 + 6),
}
V_SOP = VOICE_RANGES['soprano'].range_and_silence_length()   # 33
V_ALT = VOICE_RANGES['alto'].range_and_silence_length()      # 33
V_TEN = VOICE_RANGES['tenor'].range_and_silence_length()     # 33
V_BAS = VOICE_RANGES['bass'].range_and_silence_length()      # 40
V_TOTAL = V_ALT + V_TEN + V_BAS                              # 106
V_PAD = 128                                                  # lane-dense pad
D_IN = SEQUENCE_LENGTH * V_SOP
N_HEAD_COLS = SEQUENCE_LENGTH * V_PAD                        # 1024


def _harmonizer_kernel(x_ref, wi_ref, bi_ref, w1_ref, b1_ref, w2_ref, b2_ref,
                       wh_ref, bh_ref, o_ref):
    # Shared MLP trunk (input -> hidden1 -> relu -> hidden2 -> relu).
    # TODO(synk): dropout1 / dropout2 are identity here (inference semantics).
    x = x_ref[...]
    h = jnp.dot(x, wi_ref[...], preferred_element_type=jnp.float32) + bi_ref[...]
    h = jnp.dot(h, w1_ref[...], preferred_element_type=jnp.float32) + b1_ref[...]
    h = jnp.maximum(h, 0.0)
    h = jnp.dot(h, w2_ref[...], preferred_element_type=jnp.float32) + b2_ref[...]
    h = jnp.maximum(h, 0.0)

    # Fused heads: one wide, lane-dense matmul covering alto|tenor|bass|pad.
    z = jnp.dot(h, wh_ref[...], preferred_element_type=jnp.float32) + bh_ref[...]
    z = jnp.maximum(z, 0.0)                                   # relu before log_softmax
    z = z.reshape(BATCH_SIZE, SEQUENCE_LENGTH, V_PAD)

    lane = lax.broadcasted_iota(jnp.int32, (BATCH_SIZE, SEQUENCE_LENGTH, V_PAD), 2)
    mask_a = lane < V_ALT
    mask_t = (lane >= V_ALT) & (lane < V_ALT + V_TEN)
    mask_b = (lane >= V_ALT + V_TEN) & (lane < V_TOTAL)

    neg_big = jnp.float32(-1e30)

    def seg_lse(mask):
        # log-sum-exp over the lanes of one voice head only (others masked out)
        zm = jnp.where(mask, z, neg_big)
        m = jnp.max(zm, axis=-1, keepdims=True)
        e = jnp.exp(jnp.where(mask, z - m, neg_big))          # exp(-1e30) -> 0
        return m + jnp.log(jnp.sum(e, axis=-1, keepdims=True))

    lse = jnp.where(mask_a, seg_lse(mask_a),
          jnp.where(mask_t, seg_lse(mask_t), seg_lse(mask_b)))
    # Padded lanes carry garbage (bass lse); they are sliced away in the wrapper.
    o_ref[...] = z - lse


def prepare_fused_params(params):
    """One-time (param-load-time) reordering of the head weights into a single
    lane-dense (HIDDEN, S*128) slab: column index = s*128 + j, with
    j in [0,33)=alto, [33,66)=tenor, [66,106)=bass, [106,128)=zero pad."""
    def head3(w, b, V):
        w3 = w.reshape(HIDDEN, V, SEQUENCE_LENGTH).transpose(0, 2, 1)   # (H, S, V)
        b2 = b.reshape(V, SEQUENCE_LENGTH).T                            # (S, V)
        return w3, b2

    wa3, ba2 = head3(params['w_alto'],  params['b_alto'],  V_ALT)
    wt3, bt2 = head3(params['w_tenor'], params['b_tenor'], V_TEN)
    wb3, bb2 = head3(params['w_bass'],  params['b_bass'],  V_BAS)

    w_heads = jnp.concatenate([wa3, wt3, wb3], axis=-1)                 # (H, S, 106)
    w_heads = jnp.pad(w_heads, ((0, 0), (0, 0), (0, V_PAD - V_TOTAL)))  # (H, S, 128)
    w_heads = w_heads.reshape(HIDDEN, N_HEAD_COLS)                      # (H, S*128)

    b_heads = jnp.concatenate([ba2, bt2, bb2], axis=-1)                 # (S, 106)
    b_heads = jnp.pad(b_heads, ((0, 0), (0, V_PAD - V_TOTAL)))          # (S, 128)
    b_heads = b_heads.reshape(1, N_HEAD_COLS)                           # (1, S*128)

    return {
        'w_in': params['w_in'], 'b_in': params['b_in'],
        'w_h1': params['w_h1'], 'b_h1': params['b_h1'],
        'w_h2': params['w_h2'], 'b_h2': params['b_h2'],
        'w_heads': w_heads, 'b_heads': b_heads,
    }


@jax.jit
def harmonizer_forward(x, fused):
    B, Vs, S = x.shape
    x_flat = x.reshape(B, Vs * S)        # == torch.flatten(x, start_dim=1)

    def full(shape):
        return pl.BlockSpec(shape, lambda i, _n=len(shape): (0,) * _n)

    cost = pl.CostEstimate(
        flops=2 * B * (D_IN * HIDDEN + 2 * HIDDEN * HIDDEN + HIDDEN * N_HEAD_COLS),
        transcendentals=3 * B * SEQUENCE_LENGTH * V_PAD,
        bytes_accessed=4 * (B * D_IN + D_IN * HIDDEN + 2 * HIDDEN * HIDDEN
                            + 3 * HIDDEN + HIDDEN * N_HEAD_COLS + N_HEAD_COLS
                            + B * SEQUENCE_LENGTH * V_PAD),
    )

    out = pl.pallas_call(
        _harmonizer_kernel,
        grid=(1,),                                   # single step: no pipeline overhead
        in_specs=[
            full((B, Vs * S)),
            full((D_IN, HIDDEN)), full((1, HIDDEN)),
            full((HIDDEN, HIDDEN)), full((1, HIDDEN)),
            full((HIDDEN, HIDDEN)), full((1, HIDDEN)),
            full((HIDDEN, N_HEAD_COLS)), full((1, N_HEAD_COLS)),
        ],
        out_specs=full((B, SEQUENCE_LENGTH, V_PAD)),
        out_shape=jax.ShapeDtypeStruct((B, SEQUENCE_LENGTH, V_PAD), jnp.float32),
        compiler_params=pltpu.CompilerParams(dimension_semantics=("arbitrary",)),
        cost_estimate=cost,
    )(x_flat,
      fused['w_in'], fused['b_in'],
      fused['w_h1'], fused['b_h1'],
      fused['w_h2'], fused['b_h2'],
      fused['w_heads'], fused['b_heads'])

    # Split the lane-dense slab back into PyTorch layout (B, V, S) per voice.
    ya = jnp.transpose(out[:, :, :V_ALT], (0, 2, 1))
    yt = jnp.transpose(out[:, :, V_ALT:V_ALT + V_TEN], (0, 2, 1))
    yb = jnp.transpose(out[:, :, V_ALT + V_TEN:V_TOTAL], (0, 2, 1))
    return ya, yt, yb


def reference_forward(x, params):
    """Plain-JAX mirror of the PyTorch forward (inference mode)."""
    h = x.reshape(BATCH_SIZE, -1)
    h = h @ params['w_in'] + params['b_in']
    h = h @ params['w_h1'] + params['b_h1']
    h = jnp.maximum(h, 0.0)
    h = h @ params['w_h2'] + params['b_h2']
    h = jnp.maximum(h, 0.0)

    def head(w, b, V):
        z = jnp.maximum(h @ w + b, 0.0)
        z = z.reshape(BATCH_SIZE, V, SEQUENCE_LENGTH)
        return jax.nn.log_softmax(z, axis=1)

    return (head(params['w_alto'], params['b_alto'], V_ALT),
            head(params['w_tenor'], params['b_tenor'], V_TEN),
            head(params['w_bass'], params['b_bass'], V_BAS))


def init_params(key):
    def linear(k, fan_in, fan_out, bias_2d=True):
        k1, k2 = jax.random.split(k)
        bound = 1.0 / np.sqrt(fan_in)
        w = jax.random.uniform(k1, (fan_in, fan_out), jnp.float32, -bound, bound)
        bshape = (1, fan_out) if bias_2d else (fan_out,)
        b = jax.random.uniform(k2, bshape, jnp.float32, -bound, bound)
        return w, b

    keys = jax.random.split(key, 6)
    p = {}
    p['w_in'], p['b_in'] = linear(keys[0], D_IN, HIDDEN)
    p['w_h1'], p['b_h1'] = linear(keys[1], HIDDEN, HIDDEN)
    p['w_h2'], p['b_h2'] = linear(keys[2], HIDDEN, HIDDEN)
    p['w_alto'],  p['b_alto']  = linear(keys[3], HIDDEN, V_ALT * SEQUENCE_LENGTH, bias_2d=False)
    p['w_tenor'], p['b_tenor'] = linear(keys[4], HIDDEN, V_TEN * SEQUENCE_LENGTH, bias_2d=False)
    p['w_bass'],  p['b_bass']  = linear(keys[5], HIDDEN, V_BAS * SEQUENCE_LENGTH, bias_2d=False)
    return p


if __name__ == "__main__":
    root = jax.random.PRNGKey(0)
    k_params, k_x = jax.random.split(root)
    params = init_params(k_params)
    fused = prepare_fused_params(params)     # one-time weight reordering

    # soprano one-hot-ish input, (B, V_sop, S); any real-valued input is fine
    x = jax.random.normal(k_x, (BATCH_SIZE, V_SOP, SEQUENCE_LENGTH), jnp.float32)

    y_alto, y_tenor, y_bass = jax.block_until_ready(harmonizer_forward(x, fused))

    r_alto, r_tenor, r_bass = reference_forward(x, params)
    np.testing.assert_allclose(np.asarray(y_alto),  np.asarray(r_alto),  rtol=1e-3, atol=1e-3)
    np.testing.assert_allclose(np.asarray(y_tenor), np.asarray(r_tenor), rtol=1e-3, atol=1e-3)
    np.testing.assert_allclose(np.asarray(y_bass),  np.asarray(r_bass),  rtol=1e-3, atol=1e-3)

    assert y_alto.shape  == (BATCH_SIZE, V_ALT, SEQUENCE_LENGTH)
    assert y_tenor.shape == (BATCH_SIZE, V_TEN, SEQUENCE_LENGTH)
    assert y_bass.shape  == (BATCH_SIZE, V_BAS, SEQUENCE_LENGTH)
    print("KERNEL_OK")
</pallas_src>

<mosaic_0001>
module attributes {stable_mosaic.version = 11 : i64} {
  func.func @_harmonizer_kernel(%arg0: i32, %arg1: memref<4x264xf32, #tpu.memory_space<vmem>>, %arg2: memref<264x200xf32, #tpu.memory_space<vmem>>, %arg3: memref<1x200xf32, #tpu.memory_space<vmem>>, %arg4: memref<200x200xf32, #tpu.memory_space<vmem>>, %arg5: memref<1x200xf32, #tpu.memory_space<vmem>>, %arg6: memref<200x200xf32, #tpu.memory_space<vmem>>, %arg7: memref<1x200xf32, #tpu.memory_space<vmem>>, %arg8: memref<200x1024xf32, #tpu.memory_space<vmem>>, %arg9: memref<1x1024xf32, #tpu.memory_space<vmem>>, %arg10: memref<4x8x128xf32, #tpu.memory_space<vmem>>) attributes {dimension_semantics = [#tpu.dimension_semantics<arbitrary>], iteration_bounds = array<i64: 1>, scalar_prefetch = 0 : i64, scratch_operands = 0 : i64, tpu.core_type = #tpu.core_type<tc>, window_params = [{pipeline_mode = #tpu.pipeline_mode<synchronous>, transform_indices = @transform_0, window_bounds = array<i64: 4, 264>}, {pipeline_mode = #tpu.pipeline_mode<synchronous>, transform_indices = @transform_1, window_bounds = array<i64: 264, 200>}, {pipeline_mode = #tpu.pipeline_mode<synchronous>, transform_indices = @transform_2, window_bounds = array<i64: 1, 200>}, {pipeline_mode = #tpu.pipeline_mode<synchronous>, transform_indices = @transform_3, window_bounds = array<i64: 200, 200>}, {pipeline_mode = #tpu.pipeline_mode<synchronous>, transform_indices = @transform_4, window_bounds = array<i64: 1, 200>}, {pipeline_mode = #tpu.pipeline_mode<synchronous>, transform_indices = @transform_5, window_bounds = array<i64: 200, 200>}, {pipeline_mode = #tpu.pipeline_mode<synchronous>, transform_indices = @transform_6, window_bounds = array<i64: 1, 200>}, {pipeline_mode = #tpu.pipeline_mode<synchronous>, transform_indices = @transform_7, window_bounds = array<i64: 200, 1024>}, {pipeline_mode = #tpu.pipeline_mode<synchronous>, transform_indices = @transform_8, window_bounds = array<i64: 1, 1024>}, {pipeline_mode = #tpu.pipeline_mode<synchronous>, transform_indices = @transform_9, window_bounds = array<i64: 4, 8, 128>}]} {
    %c0 = arith.constant 0 : index
    %c0_0 = arith.constant 0 : index
    %0 = vector.load %arg1[%c0, %c0_0] : memref<4x264xf32, #tpu.memory_space<vmem>>, vector<4x264xf32>
    %c0_1 = arith.constant 0 : index
    %c0_2 = arith.constant 0 : index
    %1 = vector.load %arg2[%c0_1, %c0_2] : memref<264x200xf32, #tpu.memory_space<vmem>>, vector<264x200xf32>
    %cst = arith.constant dense<0.000000e+00> : vector<4x200xf32>
    %2 = tpu.matmul %0, %1, %cst {dimension_numbers = #tpu.dot_dimension_numbers<[1], [0], [0], [1], [0, 0, 1, 1], [], []>} : vector<4x264xf32>, vector<264x200xf32>, vector<4x200xf32> -> vector<4x200xf32>
    %c0_3 = arith.constant 0 : index
    %c0_4 = arith.constant 0 : index
    %3 = vector.load %arg3[%c0_3, %c0_4] : memref<1x200xf32, #tpu.memory_space<vmem>>, vector<1x200xf32>
    %4 = vector.broadcast %3 : vector<1x200xf32> to vector<4x200xf32>
    %5 = arith.addf %2, %4 : vector<4x200xf32>
    %c0_5 = arith.constant 0 : index
    %c0_6 = arith.constant 0 : index
    %6 = vector.load %arg4[%c0_5, %c0_6] : memref<200x200xf32, #tpu.memory_space<vmem>>, vector<200x200xf32>
    %cst_7 = arith.constant dense<0.000000e+00> : vector<4x200xf32>
    %7 = tpu.matmul %5, %6, %cst_7 {dimension_numbers = #tpu.dot_dimension_numbers<[1], [0], [0], [1], [0, 0, 1, 1], [], []>} : vector<4x200xf32>, vector<200x200xf32>, vector<4x200xf32> -> vector<4x200xf32>
    %c0_8 = arith.constant 0 : index
    %c0_9 = arith.constant 0 : index
    %8 = vector.load %arg5[%c0_8, %c0_9] : memref<1x200xf32, #tpu.memory_space<vmem>>, vector<1x200xf32>
    %9 = vector.broadcast %8 : vector<1x200xf32> to vector<4x200xf32>
    %10 = arith.addf %7, %9 : vector<4x200xf32>
    %cst_10 = arith.constant 0.000000e+00 : f32
    %11 = vector.broadcast %cst_10 : f32 to vector<4x200xf32>
    %12 = arith.maximumf %10, %11 : vector<4x200xf32>
    %c0_11 = arith.constant 0 : index
    %c0_12 = arith.constant 0 : index
    %13 = vector.load %arg6[%c0_11, %c0_12] : memref<200x200xf32, #tpu.memory_space<vmem>>, vector<200x200xf32>
    %cst_13 = arith.constant dense<0.000000e+00> : vector<4x200xf32>
    %14 = tpu.matmul %12, %13, %cst_13 {dimension_numbers = #tpu.dot_dimension_numbers<[1], [0], [0], [1], [0, 0, 1, 1], [], []>} : vector<4x200xf32>, vector<200x200xf32>, vector<4x200xf32> -> vector<4x200xf32>
    %c0_14 = arith.constant 0 : index
    %c0_15 = arith.constant 0 : index
    %15 = vector.load %arg7[%c0_14, %c0_15] : memref<1x200xf32, #tpu.memory_space<vmem>>, vector<1x200xf32>
    %16 = vector.broadcast %15 : vector<1x200xf32> to vector<4x200xf32>
    %17 = arith.addf %14, %16 : vector<4x200xf32>
    %cst_16 = arith.constant 0.000000e+00 : f32
    %18 = vector.broadcast %cst_16 : f32 to vector<4x200xf32>
    %19 = arith.maximumf %17, %18 : vector<4x200xf32>
    %c0_17 = arith.constant 0 : index
    %c0_18 = arith.constant 0 : index
    %20 = vector.load %arg8[%c0_17, %c0_18] : memref<200x1024xf32, #tpu.memory_space<vmem>>, vector<200x1024xf32>
    %cst_19 = arith.constant dense<0.000000e+00> : vector<4x1024xf32>
    %21 = tpu.matmul %19, %20, %cst_19 {dimension_numbers = #tpu.dot_dimension_numbers<[1], [0], [0], [1], [0, 0, 1, 1], [], []>} : vector<4x200xf32>, vector<200x1024xf32>, vector<4x1024xf32> -> vector<4x1024xf32>
    %c0_20 = arith.constant 0 : index
    %c0_21 = arith.constant 0 : index
    %22 = vector.load %arg9[%c0_20, %c0_21] : memref<1x1024xf32, #tpu.memory_space<vmem>>, vector<1x1024xf32>
    %23 = vector.broadcast %22 : vector<1x1024xf32> to vector<4x1024xf32>
    %24 = arith.addf %21, %23 : vector<4x1024xf32>
    %cst_22 = arith.constant 0.000000e+00 : f32
    %25 = vector.broadcast %cst_22 : f32 to vector<4x1024xf32>
    %26 = arith.maximumf %24, %25 : vector<4x1024xf32>
    %27 = vector.shape_cast %26 : vector<4x1024xf32> to vector<4x8x128xf32>
    %28 = tpu.iota {dimensions = array<i32: 2>} : vector<4x8x128xi32>
    %c33_i32 = arith.constant 33 : i32
    %29 = vector.broadcast %c33_i32 : i32 to vector<4x8x128xi32>
    %30 = arith.cmpi slt, %28, %29 : vector<4x8x128xi32>
    %c33_i32_23 = arith.constant 33 : i32
    %31 = vector.broadcast %c33_i32_23 : i32 to vector<4x8x128xi32>
    %32 = arith.cmpi sge, %28, %31 : vector<4x8x128xi32>
    %c66_i32 = arith.constant 66 : i32
    %33 = vector.broadcast %c66_i32 : i32 to vector<4x8x128xi32>
    %34 = arith.cmpi slt, %28, %33 : vector<4x8x128xi32>
    %35 = arith.andi %32, %34 : vector<4x8x128xi1>
    %c66_i32_24 = arith.constant 66 : i32
    %36 = vector.broadcast %c66_i32_24 : i32 to vector<4x8x128xi32>
    %37 = arith.cmpi sge, %28, %36 : vector<4x8x128xi32>
    %c106_i32 = arith.constant 106 : i32
    %38 = vector.broadcast %c106_i32 : i32 to vector<4x8x128xi32>
    %39 = arith.cmpi slt, %28, %38 : vector<4x8x128xi32>
    %40 = arith.andi %37, %39 : vector<4x8x128xi1>
    %cst_25 = arith.constant -1.000000e+30 : f32
    %41 = vector.broadcast %cst_25 : f32 to vector<4x8x128xf32>
    %42 = arith.select %30, %27, %41 : vector<4x8x128xi1>, vector<4x8x128xf32>
    %cst_26 = arith.constant dense<0xFF800000> : vector<4x8xf32>
    %43 = vector.multi_reduction <maximumf>, %42, %cst_26 [2] : vector<4x8x128xf32> to vector<4x8xf32>
    %44 = vector.shape_cast %43 : vector<4x8xf32> to vector<4x8x1xf32>
    %45 = vector.broadcast %44 : vector<4x8x1xf32> to vector<4x8x128xf32>
    %46 = arith.subf %27, %45 : vector<4x8x128xf32>
    %cst_27 = arith.constant -1.000000e+30 : f32
    %47 = vector.broadcast %cst_27 : f32 to vector<4x8x128xf32>
    %48 = arith.select %30, %46, %47 : vector<4x8x128xi1>, vector<4x8x128xf32>
    %49 = math.exp %48 : vector<4x8x128xf32>
    %cst_28 = arith.constant dense<0.000000e+00> : vector<4x8xf32>
    %50 = vector.multi_reduction <add>, %49, %cst_28 [2] : vector<4x8x128xf32> to vector<4x8xf32>
    %51 = vector.shape_cast %50 : vector<4x8xf32> to vector<4x8x1xf32>
    %52 = math.log %51 : vector<4x8x1xf32>
    %53 = arith.addf %44, %52 : vector<4x8x1xf32>
    %cst_29 = arith.constant -1.000000e+30 : f32
    %54 = vector.broadcast %cst_29 : f32 to vector<4x8x128xf32>
    %55 = arith.select %35, %27, %54 : vector<4x8x128xi1>, vector<4x8x128xf32>
    %cst_30 = arith.constant dense<0xFF800000> : vector<4x8xf32>
    %56 = vector.multi_reduction <maximumf>, %55, %cst_30 [2] : vector<4x8x128xf32> to vector<4x8xf32>
    %57 = vector.shape_cast %56 : vector<4x8xf32> to vector<4x8x1xf32>
    %58 = vector.broadcast %57 : vector<4x8x1xf32> to vector<4x8x128xf32>
    %59 = arith.subf %27, %58 : vector<4x8x128xf32>
    %cst_31 = arith.constant -1.000000e+30 : f32
    %60 = vector.broadcast %cst_31 : f32 to vector<4x8x128xf32>
    %61 = arith.select %35, %59, %60 : vector<4x8x128xi1>, vector<4x8x128xf32>
    %62 = math.exp %61 : vector<4x8x128xf32>
    %cst_32 = arith.constant dense<0.000000e+00> : vector<4x8xf32>
    %63 = vector.multi_reduction <add>, %62, %cst_32 [2] : vector<4x8x128xf32> to vector<4x8xf32>
    %64 = vector.shape_cast %63 : vector<4x8xf32> to vector<4x8x1xf32>
    %65 = math.log %64 : vector<4x8x1xf32>
    %66 = arith.addf %57, %65 : vector<4x8x1xf32>
    %cst_33 = arith.constant -1.000000e+30 : f32
    %67 = vector.broadcast %cst_33 : f32 to vector<4x8x128xf32>
    %68 = arith.select %40, %27, %67 : vector<4x8x128xi1>, vector<4x8x128xf32>
    %cst_34 = arith.constant dense<0xFF800000> : vector<4x8xf32>
    %69 = vector.multi_reduction <maximumf>, %68, %cst_34 [2] : vector<4x8x128xf32> to vector<4x8xf32>
    %70 = vector.shape_cast %69 : vector<4x8xf32> to vector<4x8x1xf32>
    %71 = vector.broadcast %70 : vector<4x8x1xf32> to vector<4x8x128xf32>
    %72 = arith.subf %27, %71 : vector<4x8x128xf32>
    %cst_35 = arith.constant -1.000000e+30 : f32
    %73 = vector.broadcast %cst_35 : f32 to vector<4x8x128xf32>
    %74 = arith.select %40, %72, %73 : vector<4x8x128xi1>, vector<4x8x128xf32>
    %75 = math.exp %74 : vector<4x8x128xf32>
    %cst_36 = arith.constant dense<0.000000e+00> : vector<4x8xf32>
    %76 = vector.multi_reduction <add>, %75, %cst_36 [2] : vector<4x8x128xf32> to vector<4x8xf32>
    %77 = vector.shape_cast %76 : vector<4x8xf32> to vector<4x8x1xf32>
    %78 = math.log %77 : vector<4x8x1xf32>
    %79 = arith.addf %70, %78 : vector<4x8x1xf32>
    %80 = vector.shape_cast %66 : vector<4x8x1xf32> to vector<4x8x1xf32>
    %81 = vector.broadcast %80 : vector<4x8x1xf32> to vector<4x8x128xf32>
    %82 = vector.shape_cast %79 : vector<4x8x1xf32> to vector<4x8x1xf32>
    %83 = vector.broadcast %82 : vector<4x8x1xf32> to vector<4x8x128xf32>
    %84 = arith.select %35, %81, %83 : vector<4x8x128xi1>, vector<4x8x128xf32>
    %85 = vector.shape_cast %53 : vector<4x8x1xf32> to vector<4x8x1xf32>
    %86 = vector.broadcast %85 : vector<4x8x1xf32> to vector<4x8x128xf32>
    %87 = arith.select %30, %86, %84 : vector<4x8x128xi1>, vector<4x8x128xf32>
    %88 = arith.subf %27, %87 : vector<4x8x128xf32>
    %c0_37 = arith.constant 0 : index
    %c0_38 = arith.constant 0 : index
    %c0_39 = arith.constant 0 : index
    %89 = vector.load %arg10[%c0_37, %c0_38, %c0_39] : memref<4x8x128xf32, #tpu.memory_space<vmem>>, vector<4x8x128xf32>
    tpu.vector_store %arg10[%c0_37, %c0_38, %c0_39], %88 {strides = array<i32>} : memref<4x8x128xf32, #tpu.memory_space<vmem>>, vector<4x8x128xf32>,
    return
  }
  func.func @transform_0(%arg0: i32) -> (i32, i32) {
    %c0_i32 = arith.constant 0 : i32
    %c0_i32_0 = arith.constant 0 : i32
    %c0_i32_1 = arith.constant 0 : i32
    return %c0_i32, %c0_i32_0 : i32, i32
  }
  func.func @transform_1(%arg0: i32) -> (i32, i32) {
    %c0_i32 = arith.constant 0 : i32
    %c0_i32_0 = arith.constant 0 : i32
    %c0_i32_1 = arith.constant 0 : i32
    return %c0_i32, %c0_i32_0 : i32, i32
  }
  func.func @transform_2(%arg0: i32) -> (i32, i32) {
    %c0_i32 = arith.constant 0 : i32
    %c0_i32_0 = arith.constant 0 : i32
    %c0_i32_1 = arith.constant 0 : i32
    return %c0_i32, %c0_i32_0 : i32, i32
  }
  func.func @transform_3(%arg0: i32) -> (i32, i32) {
    %c0_i32 = arith.constant 0 : i32
    %c0_i32_0 = arith.constant 0 : i32
    %c0_i32_1 = arith.constant 0 : i32
    return %c0_i32, %c0_i32_0 : i32, i32
  }
  func.func @transform_4(%arg0: i32) -> (i32, i32) {
    %c0_i32 = arith.constant 0 : i32
    %c0_i32_0 = arith.constant 0 : i32
    %c0_i32_1 = arith.constant 0 : i32
    return %c0_i32, %c0_i32_0 : i32, i32
  }
  func.func @transform_5(%arg0: i32) -> (i32, i32) {
    %c0_i32 = arith.constant 0 : i32
    %c0_i32_0 = arith.constant 0 : i32
    %c0_i32_1 = arith.constant 0 : i32
    return %c0_i32, %c0_i32_0 : i32, i32
  }
  func.func @transform_6(%arg0: i32) -> (i32, i32) {
    %c0_i32 = arith.constant 0 : i32
    %c0_i32_0 = arith.constant 0 : i32
    %c0_i32_1 = arith.constant 0 : i32
    return %c0_i32, %c0_i32_0 : i32, i32
  }
  func.func @transform_7(%arg0: i32) -> (i32, i32) {
    %c0_i32 = arith.constant 0 : i32
    %c0_i32_0 = arith.constant 0 : i32
    %c0_i32_1 = arith.constant 0 : i32
    return %c0_i32, %c0_i32_0 : i32, i32
  }
  func.func @transform_8(%arg0: i32) -> (i32, i32) {
    %c0_i32 = arith.constant 0 : i32
    %c0_i32_0 = arith.constant 0 : i32
    %c0_i32_1 = arith.constant 0 : i32
    return %c0_i32, %c0_i32_0 : i32, i32
  }
  func.func @transform_9(%arg0: i32) -> (i32, i32, i32) {
    %c0_i32 = arith.constant 0 : i32
    %c0_i32_0 = arith.constant 0 : i32
    %c0_i32_1 = arith.constant 0 : i32
    %c0_i32_2 = arith.constant 0 : i32
    return %c0_i32, %c0_i32_0, %c0_i32_1 : i32, i32, i32
  }
}

</mosaic_0001>

<llo_original>
// kernel: harmonizer_forward.1
$region0: #{harmonizer_forward.1}
  #allocation0 [shape = 'u32[]', space=smem, size = 0x4, offset = 0x4, fixed_abs, tag = 'smem constant byte address 0x4 - core index']
  #allocation1 [shape = 'u32[144,128]{1,0:T(1,128)}', space=vmem, size = 0x12000, scoped, tag = 'internal scratch']
  %s0 = inlined_call_operand.vmem [shape: f32[4,264], index: 0, kind: input, shape index: {}]
  %s1 = inlined_call_operand.hbm [shape: f32[264,200], index: 1, kind: input, shape index: {}]
  %s2 = inlined_call_operand.vmem [shape: f32[1,200], index: 2, kind: input, shape index: {}]
  %s3 = inlined_call_operand.hbm [shape: f32[200,200], index: 3, kind: input, shape index: {}]
  %s4 = inlined_call_operand.vmem [shape: f32[1,200], index: 4, kind: input, shape index: {}]
  %s5 = inlined_call_operand.hbm [shape: f32[200,200], index: 5, kind: input, shape index: {}]
  %s6 = inlined_call_operand.vmem [shape: f32[1,200], index: 6, kind: input, shape index: {}]
  %s7 = inlined_call_operand.hbm [shape: f32[200,1024], index: 7, kind: input, shape index: {}]
  %s8 = inlined_call_operand.vmem [shape: f32[1,1024], index: 8, kind: input, shape index: {}]
  %s9 = inlined_call_operand.vmem [shape: f32[4,8,128], index: 9, kind: output, shape index: {}]
  %s10 = sld [smem:[#allocation0]]
  $region62: #{harmonizer_forward.1} parent=0
    _
  %s12 = ssub.s32 1, %s10
  %s13 = scalar_select 0, %s12, %s10
  $region1: #{harmonizer_forward.1} parent=0
    #allocation2 [shape = 'u8[270336]{0}', space=vmem, size = 0x42000, scoped, tag = 'input window, operand 1, single buffered']
    #allocation3 [shape = 's32[1]{0}', space=sflag, size = 0x4, scoped, tag = 'scoped memory for harmonizer_forward.1']
    #allocation4 [shape = 'u8[204800]{0}', space=vmem, size = 0x32000, scoped, tag = 'input window, operand 3, single buffered']
    #allocation5 [shape = 's32[1]{0}', space=sflag, size = 0x4, scoped, tag = 'scoped memory for harmonizer_forward.1']
    #allocation6 [shape = 'u8[204800]{0}', space=vmem, size = 0x32000, scoped, tag = 'input window, operand 5, single buffered']
    #allocation7 [shape = 'u8[819200]{0}', space=vmem, size = 0xc8000, scoped, tag = 'input window, operand 7, single buffered']
    #allocation8 [shape = 's32[1]{0}', space=sflag, size = 0x4, scoped, tag = 'scoped memory for harmonizer_forward.1']
    %14 = vsyncpa [#allocation3], 0
    %15 = vsyncpa [#allocation5], 0
    %16 = vsyncpa [#allocation8], 0
    // Predicated region
    $region2: #{harmonizer_forward.1} parent=1 // pred_check
      _
    $region3: #{harmonizer_forward.1} parent=1 // pred_check_branch
      %18 = sbr.rel (0) target = $region5
    $region4: #{harmonizer_forward.1} parent=1 // pred_region
      _
    $region5: #{harmonizer_forward.1} parent=1 // pred_fallthru
      _
    // Predicated region
    $region6: #{harmonizer_forward.1} parent=1 // pred_check
      _
    $region7: #{harmonizer_forward.1} parent=1 // pred_check_branch
      %20 = sbr.rel (0) target = $region9
    $region8: #{harmonizer_forward.1} parent=1 // pred_region
      %s22 = ssub.s32 8448, 8448
      %23 = vsyncadd [#allocation3], %s22
      %s24 = sshll.u32 [#allocation2], 4
      %s25 = int_to_ptr.vmem [resolvable:$true] %s24
      %30 = dma.hbm_to_vmem [thread:$0]  %s1, 8448, %s25, [#allocation3], 256, 256, 16
    $region9: #{harmonizer_forward.1} parent=1 // pred_fallthru
      _
    // Predicated region
    $region10: #{harmonizer_forward.1} parent=1 // pred_check
      _
    $region11: #{harmonizer_forward.1} parent=1 // pred_check_branch
      %32 = sbr.rel (0) target = $region13
    $region12: #{harmonizer_forward.1} parent=1 // pred_region
      _
    $region13: #{harmonizer_forward.1} parent=1 // pred_fallthru
      _
    // Predicated region
    $region14: #{harmonizer_forward.1} parent=1 // pred_check
      _
    $region15: #{harmonizer_forward.1} parent=1 // pred_check_branch
      %34 = sbr.rel (0) target = $region17
    $region16: #{harmonizer_forward.1} parent=1 // pred_region
      %s36 = ssub.s32 6400, 6400
      %37 = vsyncadd [#allocation5], %s36
      %s38 = sshll.u32 [#allocation4], 4
      %s39 = int_to_ptr.vmem [resolvable:$true] %s38
      %44 = dma.hbm_to_vmem [thread:$0]  %s3, 6400, %s39, [#allocation5], 256, 256, 16
    $region17: #{harmonizer_forward.1} parent=1 // pred_fallthru
      _
    // Predicated region
    $region18: #{harmonizer_forward.1} parent=1 // pred_check
      _
    $region19: #{harmonizer_forward.1} parent=1 // pred_check_branch
      %46 = sbr.rel (0) target = $region21
    $region20: #{harmonizer_forward.1} parent=1 // pred_region
      _
    $region21: #{harmonizer_forward.1} parent=1 // pred_fallthru
      _
    // Predicated region
    $region22: #{harmonizer_forward.1} parent=1 // pred_check
      _
    $region23: #{harmonizer_forward.1} parent=1 // pred_check_branch
      %48 = sbr.rel (0) target = $region25
    $region24: #{harmonizer_forward.1} parent=1 // pred_region
      %s50 = ssub.s32 6400, 6400
      %51 = vsyncadd [#allocation5], %s50
      %s52 = sshll.u32 [#allocation6], 4
      %s53 = int_to_ptr.vmem [resolvable:$true] %s52
      %58 = dma.hbm_to_vmem [thread:$0]  %s5, 6400, %s53, [#allocation5], 256, 256, 16
    $region25: #{harmonizer_forward.1} parent=1 // pred_fallthru
      _
    // Predicated region
    $region26: #{harmonizer_forward.1} parent=1 // pred_check
      _
    $region27: #{harmonizer_forward.1} parent=1 // pred_check_branch
      %60 = sbr.rel (0) target = $region29
    $region28: #{harmonizer_forward.1} parent=1 // pred_region
      _
    $region29: #{harmonizer_forward.1} parent=1 // pred_fallthru
      _
    // Predicated region
    $region30: #{harmonizer_forward.1} parent=1 // pred_check
      _
    $region31: #{harmonizer_forward.1} parent=1 // pred_check_branch
      %62 = sbr.rel (0) target = $region33
    $region32: #{harmonizer_forward.1} parent=1 // pred_region
      %s64 = ssub.s32 25600, 25600
      %65 = vsyncadd [#allocation8], %s64
      %s66 = sshll.u32 [#allocation7], 4
      %s67 = int_to_ptr.vmem [resolvable:$true] %s66
      %72 = dma.hbm_to_vmem [thread:$0]  %s7, 25600, %s67, [#allocation8], 1024, 1024, 64
    $region33: #{harmonizer_forward.1} parent=1 // pred_fallthru
      _
    // Predicated region
    $region34: #{harmonizer_forward.1} parent=1 // pred_check
      _
    $region35: #{harmonizer_forward.1} parent=1 // pred_check_branch
      %74 = sbr.rel (0) target = $region37
    $region36: #{harmonizer_forward.1} parent=1 // pred_region
      _
    $region37: #{harmonizer_forward.1} parent=1 // pred_fallthru
      _
    // Predicated region
    $region38: #{harmonizer_forward.1} parent=1 // pred_check
      _
    $region39: #{harmonizer_forward.1} parent=1 // pred_check_branch
      %76 = sbr.rel (0) target = $region41
    $region40: #{harmonizer_forward.1} parent=1 // pred_region
      %77 = dma.done [#allocation3], 8448
    $region41: #{harmonizer_forward.1} parent=1 // pred_fallthru
      _
    // Predicated region
    $region42: #{harmonizer_forward.1} parent=1 // pred_check
      _
    $region43: #{harmonizer_forward.1} parent=1 // pred_check_branch
      %79 = sbr.rel (0) target = $region45
    $region44: #{harmonizer_forward.1} parent=1 // pred_region
      %80 = dma.done [#allocation5], 6400
    $region45: #{harmonizer_forward.1} parent=1 // pred_fallthru
      _
    // Predicated region
    $region46: #{harmonizer_forward.1} parent=1 // pred_check
      _
    $region47: #{harmonizer_forward.1} parent=1 // pred_check_branch
      %82 = sbr.rel (0) target = $region49
    $region48: #{harmonizer_forward.1} parent=1 // pred_region
      %83 = dma.done [#allocation5], 6400
    $region49: #{harmonizer_forward.1} parent=1 // pred_fallthru
      _
    // Predicated region
    $region50: #{harmonizer_forward.1} parent=1 // pred_check
      _
    $region51: #{harmonizer_forward.1} parent=1 // pred_check_branch
      %85 = sbr.rel (0) target = $region53
    $region52: #{harmonizer_forward.1} parent=1 // pred_region
      %86 = dma.done [#allocation8], 25600
    $region53: #{harmonizer_forward.1} parent=1 // pred_fallthru
      _
    %v87 = vld [vmem:[%s0] sm:$0xff]
    %v88 = vld [vmem:[%s0 + $0x8] sm:$0xf]
    %v89 = vld [vmem:[#allocation2] sm:$0xff]
    %v90 = vld [vmem:[#allocation2 + $0x8] sm:$0xff]
    %v91 = vld [vmem:[#allocation2 + $0x10] sm:$0xff]
    %v92 = vld [vmem:[#allocation2 + $0x18] sm:$0xff]
    %v93 = vld [vmem:[#allocation2 + $0x20] sm:$0xff]
    %v94 = vld [vmem:[#allocation2 + $0x28] sm:$0xff]
    %v95 = vld [vmem:[#allocation2 + $0x30] sm:$0xff]
    %v96 = vld [vmem:[#allocation2 + $0x38] sm:$0xff]
    %v97 = vld [vmem:[#allocation2 + $0x40] sm:$0xff]
    %v98 = vld [vmem:[#allocation2 + $0x48] sm:$0xff]
    %v99 = vld [vmem:[#allocation2 + $0x50] sm:$0xff]
    %v100 = vld [vmem:[#allocation2 + $0x58] sm:$0xff]
    %v101 = vld [vmem:[#allocation2 + $0x60] sm:$0xff]
    %v102 = vld [vmem:[#allocation2 + $0x68] sm:$0xff]
    %v103 = vld [vmem:[#allocation2 + $0x70] sm:$0xff]
    %v104 = vld [vmem:[#allocation2 + $0x78] sm:$0xff]
    %v105 = vld [vmem:[#allocation2 + $0x80] sm:$0xff]
    %v106 = vld [vmem:[#allocation2 + $0x88] sm:$0xff]
    %v107 = vld [vmem:[#allocation2 + $0x90] sm:$0xff]
    %v108 = vld [vmem:[#allocation2 + $0x98] sm:$0xff]
    %v109 = vld [vmem:[#allocation2 + $0xa0] sm:$0xff]
    %v110 = vld [vmem:[#allocation2 + $0xa8] sm:$0xff]
    %v111 = vld [vmem:[#allocation2 + $0xb0] sm:$0xff]
    %v112 = vld [vmem:[#allocation2 + $0xb8] sm:$0xff]
    %v113 = vld [vmem:[#allocation2 + $0xc0] sm:$0xff]
    %v114 = vld [vmem:[#allocation2 + $0xc8] sm:$0xff]
    %v115 = vld [vmem:[#allocation2 + $0xd0] sm:$0xff]
    %v116 = vld [vmem:[#allocation2 + $0xd8] sm:$0xff]
    %v117 = vld [vmem:[#allocation2 + $0xe0] sm:$0xff]
    %v118 = vld [vmem:[#allocation2 + $0xe8] sm:$0xff]
    %v119 = vld [vmem:[#allocation2 + $0xf0] sm:$0xff]
    %v120 = vld [vmem:[#allocation2 + $0xf8] sm:$0xff]
    %v121 = vld [vmem:[#allocation2 + $0x100] sm:$0xff]
    %v122 = vld [vmem:[#allocation2 + $0x108] sm:$0xff]
    %v123 = vld [vmem:[#allocation2 + $0x110] sm:$0xff]
    %v124 = vld [vmem:[#allocation2 + $0x118] sm:$0xff]
    %v125 = vld [vmem:[#allocation2 + $0x120] sm:$0xff]
    %v126 = vld [vmem:[#allocation2 + $0x128] sm:$0xff]
    %v127 = vld [vmem:[#allocation2 + $0x130] sm:$0xff]
    %v128 = vld [vmem:[#allocation2 + $0x138] sm:$0xff]
    %v129 = vld [vmem:[#allocation2 + $0x140] sm:$0xff]
    %v130 = vld [vmem:[#allocation2 + $0x148] sm:$0xff]
    %v131 = vld [vmem:[#allocation2 + $0x150] sm:$0xff]
    %v132 = vld [vmem:[#allocation2 + $0x158] sm:$0xff]
    %v133 = vld [vmem:[#allocation2 + $0x160] sm:$0xff]
    %v134 = vld [vmem:[#allocation2 + $0x168] sm:$0xff]
    %v135 = vld [vmem:[#allocation2 + $0x170] sm:$0xff]
    %v136 = vld [vmem:[#allocation2 + $0x178] sm:$0xff]
    %v137 = vld [vmem:[#allocation2 + $0x180] sm:$0xff]
    %v138 = vld [vmem:[#allocation2 + $0x188] sm:$0xff]
    %v139 = vld [vmem:[#allocation2 + $0x190] sm:$0xff]
    %v140 = vld [vmem:[#allocation2 + $0x198] sm:$0xff]
    %v141 = vld [vmem:[#allocation2 + $0x1a0] sm:$0xff]
    %v142 = vld [vmem:[#allocation2 + $0x1a8] sm:$0xff]
    %v143 = vld [vmem:[#allocation2 + $0x1b0] sm:$0xff]
    %v144 = vld [vmem:[#allocation2 + $0x1b8] sm:$0xff]
    %v145 = vld [vmem:[#allocation2 + $0x1c0] sm:$0xff]
    %v146 = vld [vmem:[#allocation2 + $0x1c8] sm:$0xff]
    %v147 = vld [vmem:[#allocation2 + $0x1d0] sm:$0xff]
    %v148 = vld [vmem:[#allocation2 + $0x1d8] sm:$0xff]
    %v149 = vld [vmem:[#allocation2 + $0x1e0] sm:$0xff]
    %v150 = vld [vmem:[#allocation2 + $0x1e8] sm:$0xff]
    %v151 = vld [vmem:[#allocation2 + $0x1f0] sm:$0xff]
    %v152 = vld [vmem:[#allocation2 + $0x1f8] sm:$0xff]
    %v153 = vld [vmem:[#allocation2 + $0x200] sm:$0xff]
    %v154 = vld [vmem:[#allocation2 + $0x208] sm:$0xff]
    %v155 = vld [vmem:[%s2] sm:$0x3]
    %v157 = vlaneseq
    %v158 = vshrl.u32 %v157, 7
    %v159 = vsub.s32 0, %v158
    %v160 = vrot.slane %v155, %v159
    %v161 = vlaneseq
    %v162 = vshrl.u32 %v161, 7
    %v163 = vsub.s32 1, %v162
    %v164 = vrot.slane %v155, %v163
    %v169 = vcombine.high %v87, %v87
    %vm171 = vcmask 64512
    %v172 = vsel %vm171, %v88, 0
    %174 = vmatprep.subr.mxu0 %v120
    %175 = vmatpush1.msra.mxu0 %v119
    %176 = vmatprep.subr.mxu0 %v118
    %177 = vmatpush1.msra.mxu0 %v117
    %178 = vmatprep.subr.mxu0 %v116
    %179 = vmatpush1.msra.mxu0 %v115
    %180 = vmatprep.subr.mxu0 %v114
    %181 = vmatpush1.msra.mxu0 %v113
    %182 = vmatprep.subr.mxu0 %v112
    %183 = vmatpush1.msra.mxu0 %v111
    %184 = vmatprep.subr.mxu0 %v110
    %185 = vmatpush1.msra.mxu0 %v109
    %186 = vmatprep.subr.mxu0 %v108
    %187 = vmatpush1.msra.mxu0 %v107
    %188 = vmatprep.subr.mxu0 %v106
    %189 = vmatpush1.msra.mxu0 %v105
    %190 = vmatprep.subr.mxu0 %v104
    %191 = vmatpush1.msra.mxu0 %v103
    %192 = vmatprep.subr.mxu0 %v102
    %193 = vmatpush1.msra.mxu0 %v101
    %194 = vmatprep.subr.mxu0 %v100
    %195 = vmatpush1.msra.mxu0 %v99
    %196 = vmatprep.subr.mxu0 %v98
    %197 = vmatpush1.msra.mxu0 %v97
    %198 = vmatprep.subr.mxu0 %v96
    %199 = vmatpush1.msra.mxu0 %v95
    %200 = vmatprep.subr.mxu0 %v94
    %201 = vmatpush1.msra.mxu0 %v93
    %202 = vmatprep.subr.mxu0 %v92
    %203 = vmatpush1.msra.mxu0 %v91
    %204 = vmatprep.subr.mxu0 %v90
    %205 = vmatpush1.msra.mxu0 %v89
    %206 = vmatprep.subr.mxu0 %v152
    %207 = vmatpush2.msra.mxu0 %v151
    %208 = vmatprep.subr.mxu0 %v150
    %209 = vmatpush2.msra.mxu0 %v149
    %210 = vmatprep.subr.mxu0 %v148
    %211 = vmatpush2.msra.mxu0 %v147
    %212 = vmatprep.subr.mxu0 %v146
    %213 = vmatpush2.msra.mxu0 %v145
    %214 = vmatprep.subr.mxu0 %v144
    %215 = vmatpush2.msra.mxu0 %v143
    %216 = vmatprep.subr.mxu0 %v142
    %217 = vmatpush2.msra.mxu0 %v141
    %218 = vmatprep.subr.mxu0 %v140
    %219 = vmatpush2.msra.mxu0 %v139
    %220 = vmatprep.subr.mxu0 %v138
    %221 = vmatpush2.msra.mxu0 %v137
    %222 = vmatprep.subr.mxu0 %v136
    %223 = vmatpush2.msra.mxu0 %v135
    %224 = vmatprep.subr.mxu0 %v134
    %225 = vmatpush2.msra.mxu0 %v133
    %226 = vmatprep.subr.mxu0 %v132
    %227 = vmatpush2.msra.mxu0 %v131
    %228 = vmatprep.subr.mxu0 %v130
    %229 = vmatpush2.msra.mxu0 %v129
    %230 = vmatprep.subr.mxu0 %v128
    %231 = vmatpush2.msra.mxu0 %v127
    %232 = vmatprep.subr.mxu0 %v126
    %233 = vmatpush2.msra.mxu0 %v125
    %234 = vmatprep.subr.mxu0 %v124
    %235 = vmatpush2.msra.mxu0 %v123
    %236 = vmatprep.subr.mxu0 %v122
    %237 = vmatpush2.msra.mxu0 %v121
    %238 = vmatprep.mubr.f32.mxu0 %v169
    %239 = vmatmul.mubr.f32.gmra.mxu0 %v87
    %v240 = vpop.f32.mrf.mxu0
    %v241 = vadd.f32 %v160, %v240
    %v242 = vpop.f32.mrf.mxu0
    %v243 = vadd.f32 %v164, %v242
    %244 = vdwg.mxu0
    %245 = vmatprep.subr.mxu0 0.0
    %246 = vmatpush1.msra.mxu0 0.0
    %247 = vmatprep.subr.mxu0 0.0
    %248 = vmatpush1.msra.mxu0 0.0
    %249 = vmatprep.subr.mxu0 0.0
    %250 = vmatpush1.msra.mxu0 0.0
    %251 = vmatprep.subr.mxu0 0.0
    %252 = vmatpush1.msra.mxu0 0.0
    %253 = vmatprep.subr.mxu0 0.0
    %254 = vmatpush1.msra.mxu0 0.0
    %255 = vmatprep.subr.mxu0 0.0
    %256 = vmatpush1.msra.mxu0 0.0
    %257 = vmatprep.subr.mxu0 0.0
    %258 = vmatpush1.msra.mxu0 0.0
    %259 = vmatprep.subr.mxu0 0.0
    %260 = vmatpush1.msra.mxu0 0.0
    %261 = vmatprep.subr.mxu0 0.0
    %262 = vmatpush1.msra.mxu0 0.0
    %263 = vmatprep.subr.mxu0 0.0
    %264 = vmatpush1.msra.mxu0 0.0
    %265 = vmatprep.subr.mxu0 0.0
    %266 = vmatpush1.msra.mxu0 0.0
    %267 = vmatprep.subr.mxu0 0.0
    %268 = vmatpush1.msra.mxu0 0.0
    %269 = vmatprep.subr.mxu0 0.0
    %270 = vmatpush1.msra.mxu0 0.0
    %271 = vmatprep.subr.mxu0 0.0
    %272 = vmatpush1.msra.mxu0 0.0
    %273 = vmatprep.subr.mxu0 0.0
    %274 = vmatpush1.msra.mxu0 0.0
    %275 = vmatprep.subr.mxu0 %v154
    %276 = vmatpush1.msra.mxu0 %v153
    %277 = vmatprep.subr.mxu0 0.0
    %278 = vmatpush2.msra.mxu0 0.0
    %279 = vmatprep.subr.mxu0 0.0
    %280 = vmatpush2.msra.mxu0 0.0
    %281 = vmatprep.subr.mxu0 0.0
    %282 = vmatpush2.msra.mxu0 0.0
    %283 = vmatprep.subr.mxu0 0.0
    %284 = vmatpush2.msra.mxu0 0.0
    %285 = vmatprep.subr.mxu0 0.0
    %286 = vmatpush2.msra.mxu0 0.0
    %287 = vmatprep.subr.mxu0 0.0
    %288 = vmatpush2.msra.mxu0 0.0
    %289 = vmatprep.subr.mxu0 0.0
    %290 = vmatpush2.msra.mxu0 0.0
    %291 = vmatprep.subr.mxu0 0.0
    %292 = vmatpush2.msra.mxu0 0.0
    %293 = vmatprep.subr.mxu0 0.0
    %294 = vmatpush2.msra.mxu0 0.0
    %295 = vmatprep.subr.mxu0 0.0
    %296 = vmatpush2.msra.mxu0 0.0
    %297 = vmatprep.subr.mxu0 0.0
    %298 = vmatpush2.msra.mxu0 0.0
    %299 = vmatprep.subr.mxu0 0.0
    %300 = vmatpush2.msra.mxu0 0.0
    %301 = vmatprep.subr.mxu0 0.0
    %302 = vmatpush2.msra.mxu0 0.0
    %303 = vmatprep.subr.mxu0 0.0
    %304 = vmatpush2.msra.mxu0 0.0
    %305 = vmatprep.subr.mxu0 0.0
    %306 = vmatpush2.msra.mxu0 0.0
    %307 = vmatprep.subr.mxu0 0.0
    %308 = vmatpush2.msra.mxu0 0.0
    %309 = vmatprep.mubr.f32.mxu0 0.0
    %310 = vmatmul.mubr.f32.gmra.mxu0 %v172
    %v311 = vpop.f32.mrf.mxu0
    %v312 = vadd.f32 %v241, %v311
    %v313 = vpop.f32.mrf.mxu0
    %v314 = vadd.f32 %v243, %v313
    %315 = vdwg.mxu0
    %v316 = vld [vmem:[#allocation4] sm:$0xff]
    %v317 = vld [vmem:[#allocation4 + $0x8] sm:$0xff]
    %v318 = vld [vmem:[#allocation4 + $0x10] sm:$0xff]
    %v319 = vld [vmem:[#allocation4 + $0x18] sm:$0xff]
    %v320 = vld [vmem:[#allocation4 + $0x20] sm:$0xff]
    %v321 = vld [vmem:[#allocation4 + $0x28] sm:$0xff]
    %v322 = vld [vmem:[#allocation4 + $0x30] sm:$0xff]
    %v323 = vld [vmem:[#allocation4 + $0x38] sm:$0xff]
    %v324 = vld [vmem:[#allocation4 + $0x40] sm:$0xff]
    %v325 = vld [vmem:[#allocation4 + $0x48] sm:$0xff]
    %v326 = vld [vmem:[#allocation4 + $0x50] sm:$0xff]
    %v327 = vld [vmem:[#allocation4 + $0x58] sm:$0xff]
    %v328 = vld [vmem:[#allocation4 + $0x60] sm:$0xff]
    %v329 = vld [vmem:[#allocation4 + $0x68] sm:$0xff]
    %v330 = vld [vmem:[#allocation4 + $0x70] sm:$0xff]
    %v331 = vld [vmem:[#allocation4 + $0x78] sm:$0xff]
    %v332 = vld [vmem:[#allocation4 + $0x80] sm:$0xff]
    %v333 = vld [vmem:[#allocation4 + $0x88] sm:$0xff]
    %v334 = vld [vmem:[#allocation4 + $0x90] sm:$0xff]
    %v335 = vld [vmem:[#allocation4 + $0x98] sm:$0xff]
    %v336 = vld [vmem:[#allocation4 + $0xa0] sm:$0xff]
    %v337 = vld [vmem:[#allocation4 + $0xa8] sm:$0xff]
    %v338 = vld [vmem:[#allocation4 + $0xb0] sm:$0xff]
    %v339 = vld [vmem:[#allocation4 + $0xb8] sm:$0xff]
    %v340 = vld [vmem:[#allocation4 + $0xc0] sm:$0xff]
    %v341 = vld [vmem:[#allocation4 + $0xc8] sm:$0xff]
    %v342 = vld [vmem:[#allocation4 + $0xd0] sm:$0xff]
    %v343 = vld [vmem:[#allocation4 + $0xd8] sm:$0xff]
    %v344 = vld [vmem:[#allocation4 + $0xe0] sm:$0xff]
    %v345 = vld [vmem:[#allocation4 + $0xe8] sm:$0xff]
    %v346 = vld [vmem:[#allocation4 + $0xf0] sm:$0xff]
    %v347 = vld [vmem:[#allocation4 + $0xf8] sm:$0xff]
    %v348 = vld [vmem:[#allocation4 + $0x100] sm:$0xff]
    %v349 = vld [vmem:[#allocation4 + $0x108] sm:$0xff]
    %v350 = vld [vmem:[#allocation4 + $0x110] sm:$0xff]
    %v351 = vld [vmem:[#allocation4 + $0x118] sm:$0xff]
    %v352 = vld [vmem:[#allocation4 + $0x120] sm:$0xff]
    %v353 = vld [vmem:[#allocation4 + $0x128] sm:$0xff]
    %v354 = vld [vmem:[#allocation4 + $0x130] sm:$0xff]
    %v355 = vld [vmem:[#allocation4 + $0x138] sm:$0xff]
    %v356 = vld [vmem:[#allocation4 + $0x140] sm:$0xff]
    %v357 = vld [vmem:[#allocation4 + $0x148] sm:$0xff]
    %v358 = vld [vmem:[#allocation4 + $0x150] sm:$0xff]
    %v359 = vld [vmem:[#allocation4 + $0x158] sm:$0xff]
    %v360 = vld [vmem:[#allocation4 + $0x160] sm:$0xff]
    %v361 = vld [vmem:[#allocation4 + $0x168] sm:$0xff]
    %v362 = vld [vmem:[#allocation4 + $0x170] sm:$0xff]
    %v363 = vld [vmem:[#allocation4 + $0x178] sm:$0xff]
    %v364 = vld [vmem:[#allocation4 + $0x180] sm:$0xff]
    %v365 = vld [vmem:[#allocation4 + $0x188] sm:$0xff]
    %v366 = vld [vmem:[%s4] sm:$0x3]
    %v368 = vlaneseq
    %v369 = vshrl.u32 %v368, 7
    %v370 = vsub.s32 0, %v369
    %v371 = vrot.slane %v366, %v370
    %v372 = vlaneseq
    %v373 = vshrl.u32 %v372, 7
    %v374 = vsub.s32 1, %v373
    %v375 = vrot.slane %v366, %v374
    %vm378 = vcmask 588800
    %v380 = vsel %vm378, %v314, 0
    %382 = vmatprep.subr.mxu0 %v347
    %383 = vmatpush1.msra.mxu0 %v346
    %384 = vmatprep.subr.mxu0 %v345
    %385 = vmatpush1.msra.mxu0 %v344
    %386 = vmatprep.subr.mxu0 %v343
    %387 = vmatpush1.msra.mxu0 %v342
    %388 = vmatprep.subr.mxu0 %v341
    %389 = vmatpush1.msra.mxu0 %v340
    %390 = vmatprep.subr.mxu0 %v339
    %391 = vmatpush1.msra.mxu0 %v338
    %392 = vmatprep.subr.mxu0 %v337
    %393 = vmatpush1.msra.mxu0 %v336
    %394 = vmatprep.subr.mxu0 %v335
    %395 = vmatpush1.msra.mxu0 %v334
    %396 = vmatprep.subr.mxu0 %v333
    %397 = vmatpush1.msra.mxu0 %v332
    %398 = vmatprep.subr.mxu0 %v331
    %399 = vmatpush1.msra.mxu0 %v330
    %400 = vmatprep.subr.mxu0 %v329
    %401 = vmatpush1.msra.mxu0 %v328
    %402 = vmatprep.subr.mxu0 %v327
    %403 = vmatpush1.msra.mxu0 %v326
    %404 = vmatprep.subr.mxu0 %v325
    %405 = vmatpush1.msra.mxu0 %v324
    %406 = vmatprep.subr.mxu0 %v323
    %407 = vmatpush1.msra.mxu0 %v322
    %408 = vmatprep.subr.mxu0 %v321
    %409 = vmatpush1.msra.mxu0 %v320
    %410 = vmatprep.subr.mxu0 %v319
    %411 = vmatpush1.msra.mxu0 %v318
    %412 = vmatprep.subr.mxu0 %v317
    %413 = vmatpush1.msra.mxu0 %v316
    %414 = vmatprep.subr.mxu0 0.0
    %415 = vmatpush2.msra.mxu0 0.0
    %416 = vmatprep.subr.mxu0 0.0
    %417 = vmatpush2.msra.mxu0 0.0
    %418 = vmatprep.subr.mxu0 0.0
    %419 = vmatpush2.msra.mxu0 0.0
    %420 = vmatprep.subr.mxu0 0.0
    %421 = vmatpush2.msra.mxu0 0.0
    %422 = vmatprep.subr.mxu0 0.0
    %423 = vmatpush2.msra.mxu0 0.0
    %424 = vmatprep.subr.mxu0 0.0
    %425 = vmatpush2.msra.mxu0 0.0
    %426 = vmatprep.subr.mxu0 0.0
    %427 = vmatpush2.msra.mxu0 0.0
    %428 = vmatprep.subr.mxu0 %v365
    %429 = vmatpush2.msra.mxu0 %v364
    %430 = vmatprep.subr.mxu0 %v363
    %431 = vmatpush2.msra.mxu0 %v362
    %432 = vmatprep.subr.mxu0 %v361
    %433 = vmatpush2.msra.mxu0 %v360
    %434 = vmatprep.subr.mxu0 %v359
    %435 = vmatpush2.msra.mxu0 %v358
    %436 = vmatprep.subr.mxu0 %v357
    %437 = vmatpush2.msra.mxu0 %v356
    %438 = vmatprep.subr.mxu0 %v355
    %439 = vmatpush2.msra.mxu0 %v354
    %440 = vmatprep.subr.mxu0 %v353
    %441 = vmatpush2.msra.mxu0 %v352
    %442 = vmatprep.subr.mxu0 %v351
    %443 = vmatpush2.msra.mxu0 %v350
    %444 = vmatprep.subr.mxu0 %v349
    %445 = vmatpush2.msra.mxu0 %v348
    %446 = vmatprep.mubr.f32.mxu0 %v380
    %447 = vmatmul.mubr.f32.gmra.mxu0 %v312
    %v448 = vpop.f32.mrf.mxu0
    %v449 = vadd.f32 %v371, %v448
    %v450 = vpop.f32.mrf.mxu0
    %v451 = vadd.f32 %v375, %v450
    %452 = vdwg.mxu0
    %v453 = vmax.f32 %v449, 0.0
    %v454 = vmax.f32 %v451, 0.0
    %v455 = vld [vmem:[#allocation6] sm:$0xff]
    %v456 = vld [vmem:[#allocation6 + $0x8] sm:$0xff]
    %v457 = vld [vmem:[#allocation6 + $0x10] sm:$0xff]
    %v458 = vld [vmem:[#allocation6 + $0x18] sm:$0xff]
    %v459 = vld [vmem:[#allocation6 + $0x20] sm:$0xff]
    %v460 = vld [vmem:[#allocation6 + $0x28] sm:$0xff]
    %v461 = vld [vmem:[#allocation6 + $0x30] sm:$0xff]
    %v462 = vld [vmem:[#allocation6 + $0x38] sm:$0xff]
    %v463 = vld [vmem:[#allocation6 + $0x40] sm:$0xff]
    %v464 = vld [vmem:[#allocation6 + $0x48] sm:$0xff]
    %v465 = vld [vmem:[#allocation6 + $0x50] sm:$0xff]
    %v466 = vld [vmem:[#allocation6 + $0x58] sm:$0xff]
    %v467 = vld [vmem:[#allocation6 + $0x60] sm:$0xff]
    %v468 = vld [vmem:[#allocation6 + $0x68] sm:$0xff]
    %v469 = vld [vmem:[#allocation6 + $0x70] sm:$0xff]
    %v470 = vld [vmem:[#allocation6 + $0x78] sm:$0xff]
    %v471 = vld [vmem:[#allocation6 + $0x80] sm:$0xff]
    %v472 = vld [vmem:[#allocation6 + $0x88] sm:$0xff]
    %v473 = vld [vmem:[#allocation6 + $0x90] sm:$0xff]
    %v474 = vld [vmem:[#allocation6 + $0x98] sm:$0xff]
    %v475 = vld [vmem:[#allocation6 + $0xa0] sm:$0xff]
    %v476 = vld [vmem:[#allocation6 + $0xa8] sm:$0xff]
    %v477 = vld [vmem:[#allocation6 + $0xb0] sm:$0xff]
    %v478 = vld [vmem:[#allocation6 + $0xb8] sm:$0xff]
    %v479 = vld [vmem:[#allocation6 + $0xc0] sm:$0xff]
    %v480 = vld [vmem:[#allocation6 + $0xc8] sm:$0xff]
    %v481 = vld [vmem:[#allocation6 + $0xd0] sm:$0xff]
    %v482 = vld [vmem:[#allocation6 + $0xd8] sm:$0xff]
    %v483 = vld [vmem:[#allocation6 + $0xe0] sm:$0xff]
    %v484 = vld [vmem:[#allocation6 + $0xe8] sm:$0xff]
    %v485 = vld [vmem:[#allocation6 + $0xf0] sm:$0xff]
    %v486 = vld [vmem:[#allocation6 + $0xf8] sm:$0xff]
    %v487 = vld [vmem:[#allocation6 + $0x100] sm:$0xff]
    %v488 = vld [vmem:[#allocation6 + $0x108] sm:$0xff]
    %v489 = vld [vmem:[#allocation6 + $0x110] sm:$0xff]
    %v490 = vld [vmem:[#allocation6 + $0x118] sm:$0xff]
    %v491 = vld [vmem:[#allocation6 + $0x120] sm:$0xff]
    %v492 = vld [vmem:[#allocation6 + $0x128] sm:$0xff]
    %v493 = vld [vmem:[#allocation6 + $0x130] sm:$0xff]
    %v494 = vld [vmem:[#allocation6 + $0x138] sm:$0xff]
    %v495 = vld [vmem:[#allocation6 + $0x140] sm:$0xff]
    %v496 = vld [vmem:[#allocation6 + $0x148] sm:$0xff]
    %v497 = vld [vmem:[#allocation6 + $0x150] sm:$0xff]
    %v498 = vld [vmem:[#allocation6 + $0x158] sm:$0xff]
    %v499 = vld [vmem:[#allocation6 + $0x160] sm:$0xff]
    %v500 = vld [vmem:[#allocation6 + $0x168] sm:$0xff]
    %v501 = vld [vmem:[#allocation6 + $0x170] sm:$0xff]
    %v502 = vld [vmem:[#allocation6 + $0x178] sm:$0xff]
    %v503 = vld [vmem:[#allocation6 + $0x180] sm:$0xff]
    %v504 = vld [vmem:[#allocation6 + $0x188] sm:$0xff]
    %v505 = vld [vmem:[%s6] sm:$0x3]
    %v507 = vlaneseq
    %v508 = vshrl.u32 %v507, 7
    %v509 = vsub.s32 0, %v508
    %v510 = vrot.slane %v505, %v509
    %v511 = vlaneseq
    %v512 = vshrl.u32 %v511, 7
    %v513 = vsub.s32 1, %v512
    %v514 = vrot.slane %v505, %v513
    %v518 = vsel %vm378, %v454, 0
    %520 = vmatprep.subr.mxu0 %v486
    %521 = vmatpush1.msra.mxu0 %v485
    %522 = vmatprep.subr.mxu0 %v484
    %523 = vmatpush1.msra.mxu0 %v483
    %524 = vmatprep.subr.mxu0 %v482
    %525 = vmatpush1.msra.mxu0 %v481
    %526 = vmatprep.subr.mxu0 %v480
    %527 = vmatpush1.msra.mxu0 %v479
    %528 = vmatprep.subr.mxu0 %v478
    %529 = vmatpush1.msra.mxu0 %v477
    %530 = vmatprep.subr.mxu0 %v476
    %531 = vmatpush1.msra.mxu0 %v475
    %532 = vmatprep.subr.mxu0 %v474
    %533 = vmatpush1.msra.mxu0 %v473
    %534 = vmatprep.subr.mxu0 %v472
    %535 = vmatpush1.msra.mxu0 %v471
    %536 = vmatprep.subr.mxu0 %v470
    %537 = vmatpush1.msra.mxu0 %v469
    %538 = vmatprep.subr.mxu0 %v468
    %539 = vmatpush1.msra.mxu0 %v467
    %540 = vmatprep.subr.mxu0 %v466
    %541 = vmatpush1.msra.mxu0 %v465
    %542 = vmatprep.subr.mxu0 %v464
    %543 = vmatpush1.msra.mxu0 %v463
    %544 = vmatprep.subr.mxu0 %v462
    %545 = vmatpush1.msra.mxu0 %v461
    %546 = vmatprep.subr.mxu0 %v460
    %547 = vmatpush1.msra.mxu0 %v459
    %548 = vmatprep.subr.mxu0 %v458
    %549 = vmatpush1.msra.mxu0 %v457
    %550 = vmatprep.subr.mxu0 %v456
    %551 = vmatpush1.msra.mxu0 %v455
    %552 = vmatprep.subr.mxu0 0.0
    %553 = vmatpush2.msra.mxu0 0.0
    %554 = vmatprep.subr.mxu0 0.0
    %555 = vmatpush2.msra.mxu0 0.0
    %556 = vmatprep.subr.mxu0 0.0
    %557 = vmatpush2.msra.mxu0 0.0
    %558 = vmatprep.subr.mxu0 0.0
    %559 = vmatpush2.msra.mxu0 0.0
    %560 = vmatprep.subr.mxu0 0.0
    %561 = vmatpush2.msra.mxu0 0.0
    %562 = vmatprep.subr.mxu0 0.0
    %563 = vmatpush2.msra.mxu0 0.0
    %564 = vmatprep.subr.mxu0 0.0
    %565 = vmatpush2.msra.mxu0 0.0
    %566 = vmatprep.subr.mxu0 %v504
    %567 = vmatpush2.msra.mxu0 %v503
    %568 = vmatprep.subr.mxu0 %v502
    %569 = vmatpush2.msra.mxu0 %v501
    %570 = vmatprep.subr.mxu0 %v500
    %571 = vmatpush2.msra.mxu0 %v499
    %572 = vmatprep.subr.mxu0 %v498
    %573 = vmatpush2.msra.mxu0 %v497
    %574 = vmatprep.subr.mxu0 %v496
    %575 = vmatpush2.msra.mxu0 %v495
    %576 = vmatprep.subr.mxu0 %v494
    %577 = vmatpush2.msra.mxu0 %v493
    %578 = vmatprep.subr.mxu0 %v492
    %579 = vmatpush2.msra.mxu0 %v491
    %580 = vmatprep.subr.mxu0 %v490
    %581 = vmatpush2.msra.mxu0 %v489
    %582 = vmatprep.subr.mxu0 %v488
    %583 = vmatpush2.msra.mxu0 %v487
    %584 = vmatprep.mubr.f32.mxu0 %v518
    %585 = vmatmul.mubr.f32.gmra.mxu0 %v453
    %v586 = vpop.f32.mrf.mxu0
    %v587 = vadd.f32 %v510, %v586
    %v588 = vpop.f32.mrf.mxu0
    %v589 = vadd.f32 %v514, %v588
    %590 = vdwg.mxu0
    %v591 = vmax.f32 %v587, 0.0
    %v592 = vmax.f32 %v589, 0.0
    %v593 = vld [vmem:[#allocation7] sm:$0xff]
    %v594 = vld [vmem:[#allocation7 + $0x8] sm:$0xff]
    %v595 = vld [vmem:[#allocation7 + $0x10] sm:$0xff]
    %v596 = vld [vmem:[#allocation7 + $0x18] sm:$0xff]
    %v597 = vld [vmem:[#allocation7 + $0x20] sm:$0xff]
    %v598 = vld [vmem:[#allocation7 + $0x28] sm:$0xff]
    %v599 = vld [vmem:[#allocation7 + $0x30] sm:$0xff]
    %v600 = vld [vmem:[#allocation7 + $0x38] sm:$0xff]
    %v601 = vld [vmem:[#allocation7 + $0x40] sm:$0xff]
    %v602 = vld [vmem:[#allocation7 + $0x48] sm:$0xff]
    %v603 = vld [vmem:[#allocation7 + $0x50] sm:$0xff]
    %v604 = vld [vmem:[#allocation7 + $0x58] sm:$0xff]
    %v605 = vld [vmem:[#allocation7 + $0x60] sm:$0xff]
    %v606 = vld [vmem:[#allocation7 + $0x68] sm:$0xff]
    %v607 = vld [vmem:[#allocation7 + $0x70] sm:$0xff]
    %v608 = vld [vmem:[#allocation7 + $0x78] sm:$0xff]
    %v609 = vld [vmem:[#allocation7 + $0x80] sm:$0xff]
    %v610 = vld [vmem:[#allocation7 + $0x88] sm:$0xff]
    %v611 = vld [vmem:[#allocation7 + $0x90] sm:$0xff]
    %v612 = vld [vmem:[#allocation7 + $0x98] sm:$0xff]
    %v613 = vld [vmem:[#allocation7 + $0xa0] sm:$0xff]
    %v614 = vld [vmem:[#allocation7 + $0xa8] sm:$0xff]
    %v615 = vld [vmem:[#allocation7 + $0xb0] sm:$0xff]
    %v616 = vld [vmem:[#allocation7 + $0xb8] sm:$0xff]
    %v617 = vld [vmem:[#allocation7 + $0xc0] sm:$0xff]
    %v618 = vld [vmem:[#allocation7 + $0xc8] sm:$0xff]
    %v619 = vld [vmem:[#allocation7 + $0xd0] sm:$0xff]
    %v620 = vld [vmem:[#allocation7 + $0xd8] sm:$0xff]
    %v621 = vld [vmem:[#allocation7 + $0xe0] sm:$0xff]
    %v622 = vld [vmem:[#allocation7 + $0xe8] sm:$0xff]
    %v623 = vld [vmem:[#allocation7 + $0xf0] sm:$0xff]
    %v624 = vld [vmem:[#allocation7 + $0xf8] sm:$0xff]
    %v625 = vld [vmem:[#allocation7 + $0x100] sm:$0xff]
    %v626 = vld [vmem:[#allocation7 + $0x108] sm:$0xff]
    %v627 = vld [vmem:[#allocation7 + $0x110] sm:$0xff]
    %v628 = vld [vmem:[#allocation7 + $0x118] sm:$0xff]
    %v629 = vld [vmem:[#allocation7 + $0x120] sm:$0xff]
    %v630 = vld [vmem:[#allocation7 + $0x128] sm:$0xff]
    %v631 = vld [vmem:[#allocation7 + $0x130] sm:$0xff]
    %v632 = vld [vmem:[#allocation7 + $0x138] sm:$0xff]
    %v633 = vld [vmem:[#allocation7 + $0x140] sm:$0xff]
    %v634 = vld [vmem:[#allocation7 + $0x148] sm:$0xff]
    %v635 = vld [vmem:[#allocation7 + $0x150] sm:$0xff]
    %v636 = vld [vmem:[#allocation7 + $0x158] sm:$0xff]
    %v637 = vld [vmem:[#allocation7 + $0x160] sm:$0xff]
    %v638 = vld [vmem:[#allocation7 + $0x168] sm:$0xff]
    %v639 = vld [vmem:[#allocation7 + $0x170] sm:$0xff]
    %v640 = vld [vmem:[#allocation7 + $0x178] sm:$0xff]
    %v641 = vld [vmem:[#allocation7 + $0x180] sm:$0xff]
    %v642 = vld [vmem:[#allocation7 + $0x188] sm:$0xff]
    %v643 = vld [vmem:[#allocation7 + $0x190] sm:$0xff]
    %v644 = vld [vmem:[#allocation7 + $0x198] sm:$0xff]
    %v645 = vld [vmem:[#allocation7 + $0x1a0] sm:$0xff]
    %v646 = vld [vmem:[#allocation7 + $0x1a8] sm:$0xff]
    %v647 = vld [vmem:[#allocation7 + $0x1b0] sm:$0xff]
    %v648 = vld [vmem:[#allocation7 + $0x1b8] sm:$0xff]
    %v649 = vld [vmem:[#allocation7 + $0x1c0] sm:$0xff]
    %v650 = vld [vmem:[#allocation7 + $0x1c8] sm:$0xff]
    %v651 = vld [vmem:[#allocation7 + $0x1d0] sm:$0xff]
    %v652 = vld [vmem:[#allocation7 + $0x1d8] sm:$0xff]
    %v653 = vld [vmem:[#allocation7 + $0x1e0] sm:$0xff]
    %v654 = vld [vmem:[#allocation7 + $0x1e8] sm:$0xff]
    %v655 = vld [vmem:[#allocation7 + $0x1f0] sm:$0xff]
    %v656 = vld [vmem:[#allocation7 + $0x1f8] sm:$0xff]
    %v657 = vld [vmem:[#allocation7 + $0x200] sm:$0xff]
    %v658 = vld [vmem:[#allocation7 + $0x208] sm:$0xff]
    %v659 = vld [vmem:[#allocation7 + $0x210] sm:$0xff]
    %v660 = vld [vmem:[#allocation7 + $0x218] sm:$0xff]
    %v661 = vld [vmem:[#allocation7 + $0x220] sm:$0xff]
    %v662 = vld [vmem:[#allocation7 + $0x228] sm:$0xff]
    %v663 = vld [vmem:[#allocation7 + $0x230] sm:$0xff]
    %v664 = vld [vmem:[#allocation7 + $0x238] sm:$0xff]
    %v665 = vld [vmem:[#allocation7 + $0x240] sm:$0xff]
    %v666 = vld [vmem:[#allocation7 + $0x248] sm:$0xff]
    %v667 = vld [vmem:[#allocation7 + $0x250] sm:$0xff]
    %v668 = vld [vmem:[#allocation7 + $0x258] sm:$0xff]
    %v669 = vld [vmem:[#allocation7 + $0x260] sm:$0xff]
    %v670 = vld [vmem:[#allocation7 + $0x268] sm:$0xff]
    %v671 = vld [vmem:[#allocation7 + $0x270] sm:$0xff]
    %v672 = vld [vmem:[#allocation7 + $0x278] sm:$0xff]
    %v673 = vld [vmem:[#allocation7 + $0x280] sm:$0xff]
    %v674 = vld [vmem:[#allocation7 + $0x288] sm:$0xff]
    %v675 = vld [vmem:[#allocation7 + $0x290] sm:$0xff]
    %v676 = vld [vmem:[#allocation7 + $0x298] sm:$0xff]
    %v677 = vld [vmem:[#allocation7 + $0x2a0] sm:$0xff]
    %v678 = vld [vmem:[#allocation7 + $0x2a8] sm:$0xff]
    %v679 = vld [vmem:[#allocation7 + $0x2b0] sm:$0xff]
    %v680 = vld [vmem:[#allocation7 + $0x2b8] sm:$0xff]
    %v681 = vld [vmem:[#allocation7 + $0x2c0] sm:$0xff]
    %v682 = vld [vmem:[#allocation7 + $0x2c8] sm:$0xff]
    %v683 = vld [vmem:[#allocation7 + $0x2d0] sm:$0xff]
    %v684 = vld [vmem:[#allocation7 + $0x2d8] sm:$0xff]
    %v685 = vld [vmem:[#allocation7 + $0x2e0] sm:$0xff]
    %v686 = vld [vmem:[#allocation7 + $0x2e8] sm:$0xff]
    %v687 = vld [vmem:[#allocation7 + $0x2f0] sm:$0xff]
    %v688 = vld [vmem:[#allocation7 + $0x2f8] sm:$0xff]
    %v689 = vld [vmem:[#allocation7 + $0x300] sm:$0xff]
    %v690 = vld [vmem:[#allocation7 + $0x308] sm:$0xff]
    %v691 = vld [vmem:[#allocation7 + $0x310] sm:$0xff]
    %v692 = vld [vmem:[#allocation7 + $0x318] sm:$0xff]
    %v693 = vld [vmem:[#allocation7 + $0x320] sm:$0xff]
    %v694 = vld [vmem:[#allocation7 + $0x328] sm:$0xff]
    %v695 = vld [vmem:[#allocation7 + $0x330] sm:$0xff]
    %v696 = vld [vmem:[#allocation7 + $0x338] sm:$0xff]
    %v697 = vld [vmem:[#allocation7 + $0x340] sm:$0xff]
    %v698 = vld [vmem:[#allocation7 + $0x348] sm:$0xff]
    %v699 = vld [vmem:[#allocation7 + $0x350] sm:$0xff]
    %v700 = vld [vmem:[#allocation7 + $0x358] sm:$0xff]
    %v701 = vld [vmem:[#allocation7 + $0x360] sm:$0xff]
    %v702 = vld [vmem:[#allocation7 + $0x368] sm:$0xff]
    %v703 = vld [vmem:[#allocation7 + $0x370] sm:$0xff]
    %v704 = vld [vmem:[#allocation7 + $0x378] sm:$0xff]
    %v705 = vld [vmem:[#allocation7 + $0x380] sm:$0xff]
    %v706 = vld [vmem:[#allocation7 + $0x388] sm:$0xff]
    %v707 = vld [vmem:[#allocation7 + $0x390] sm:$0xff]
    %v708 = vld [vmem:[#allocation7 + $0x398] sm:$0xff]
    %v709 = vld [vmem:[#allocation7 + $0x3a0] sm:$0xff]
    %v710 = vld [vmem:[#allocation7 + $0x3a8] sm:$0xff]
    %v711 = vld [vmem:[#allocation7 + $0x3b0] sm:$0xff]
    %v712 = vld [vmem:[#allocation7 + $0x3b8] sm:$0xff]
    %v713 = vld [vmem:[#allocation7 + $0x3c0] sm:$0xff]
    %v714 = vld [vmem:[#allocation7 + $0x3c8] sm:$0xff]
    %v715 = vld [vmem:[#allocation7 + $0x3d0] sm:$0xff]
    %v716 = vld [vmem:[#allocation7 + $0x3d8] sm:$0xff]
    %v717 = vld [vmem:[#allocation7 + $0x3e0] sm:$0xff]
    %v718 = vld [vmem:[#allocation7 + $0x3e8] sm:$0xff]
    %v719 = vld [vmem:[#allocation7 + $0x3f0] sm:$0xff]
    %v720 = vld [vmem:[#allocation7 + $0x3f8] sm:$0xff]
    %v721 = vld [vmem:[#allocation7 + $0x400] sm:$0xff]
    %v722 = vld [vmem:[#allocation7 + $0x408] sm:$0xff]
    %v723 = vld [vmem:[#allocation7 + $0x410] sm:$0xff]
    %v724 = vld [vmem:[#allocation7 + $0x418] sm:$0xff]
    %v725 = vld [vmem:[#allocation7 + $0x420] sm:$0xff]
    %v726 = vld [vmem:[#allocation7 + $0x428] sm:$0xff]
    %v727 = vld [vmem:[#allocation7 + $0x430] sm:$0xff]
    %v728 = vld [vmem:[#allocation7 + $0x438] sm:$0xff]
    %v729 = vld [vmem:[#allocation7 + $0x440] sm:$0xff]
    %v730 = vld [vmem:[#allocation7 + $0x448] sm:$0xff]
    %v731 = vld [vmem:[#allocation7 + $0x450] sm:$0xff]
    %v732 = vld [vmem:[#allocation7 + $0x458] sm:$0xff]
    %v733 = vld [vmem:[#allocation7 + $0x460] sm:$0xff]
    %v734 = vld [vmem:[#allocation7 + $0x468] sm:$0xff]
    %v735 = vld [vmem:[#allocation7 + $0x470] sm:$0xff]
    %v736 = vld [vmem:[#allocation7 + $0x478] sm:$0xff]
    %v737 = vld [vmem:[#allocation7 + $0x480] sm:$0xff]
    %v738 = vld [vmem:[#allocation7 + $0x488] sm:$0xff]
    %v739 = vld [vmem:[#allocation7 + $0x490] sm:$0xff]
    %v740 = vld [vmem:[#allocation7 + $0x498] sm:$0xff]
    %v741 = vld [vmem:[#allocation7 + $0x4a0] sm:$0xff]
    %v742 = vld [vmem:[#allocation7 + $0x4a8] sm:$0xff]
    %v743 = vld [vmem:[#allocation7 + $0x4b0] sm:$0xff]
    %v744 = vld [vmem:[#allocation7 + $0x4b8] sm:$0xff]
    %v745 = vld [vmem:[#allocation7 + $0x4c0] sm:$0xff]
    %v746 = vld [vmem:[#allocation7 + $0x4c8] sm:$0xff]
    %v747 = vld [vmem:[#allocation7 + $0x4d0] sm:$0xff]
    %v748 = vld [vmem:[#allocation7 + $0x4d8] sm:$0xff]
    %v749 = vld [vmem:[#allocation7 + $0x4e0] sm:$0xff]
    %v750 = vld [vmem:[#allocation7 + $0x4e8] sm:$0xff]
    %v751 = vld [vmem:[#allocation7 + $0x4f0] sm:$0xff]
    %v752 = vld [vmem:[#allocation7 + $0x4f8] sm:$0xff]
    %v753 = vld [vmem:[#allocation7 + $0x500] sm:$0xff]
    %v754 = vld [vmem:[#allocation7 + $0x508] sm:$0xff]
    %v755 = vld [vmem:[#allocation7 + $0x510] sm:$0xff]
    %v756 = vld [vmem:[#allocation7 + $0x518] sm:$0xff]
    %v757 = vld [vmem:[#allocation7 + $0x520] sm:$0xff]
    %v758 = vld [vmem:[#allocation7 + $0x528] sm:$0xff]
    %v759 = vld [vmem:[#allocation7 + $0x530] sm:$0xff]
    %v760 = vld [vmem:[#allocation7 + $0x538] sm:$0xff]
    %v761 = vld [vmem:[#allocation7 + $0x540] sm:$0xff]
    %v762 = vld [vmem:[#allocation7 + $0x548] sm:$0xff]
    %v763 = vld [vmem:[#allocation7 + $0x550] sm:$0xff]
    %v764 = vld [vmem:[#allocation7 + $0x558] sm:$0xff]
    %v765 = vld [vmem:[#allocation7 + $0x560] sm:$0xff]
    %v766 = vld [vmem:[#allocation7 + $0x568] sm:$0xff]
    %v767 = vld [vmem:[#allocation7 + $0x570] sm:$0xff]
    %v768 = vld [vmem:[#allocation7 + $0x578] sm:$0xff]
    %v769 = vld [vmem:[#allocation7 + $0x580] sm:$0xff]
    %v770 = vld [vmem:[#allocation7 + $0x588] sm:$0xff]
    %v771 = vld [vmem:[#allocation7 + $0x590] sm:$0xff]
    %v772 = vld [vmem:[#allocation7 + $0x598] sm:$0xff]
    %v773 = vld [vmem:[#allocation7 + $0x5a0] sm:$0xff]
    %v774 = vld [vmem:[#allocation7 + $0x5a8] sm:$0xff]
    %v775 = vld [vmem:[#allocation7 + $0x5b0] sm:$0xff]
    %v776 = vld [vmem:[#allocation7 + $0x5b8] sm:$0xff]
    %v777 = vld [vmem:[#allocation7 + $0x5c0] sm:$0xff]
    %v778 = vld [vmem:[#allocation7 + $0x5c8] sm:$0xff]
    %v779 = vld [vmem:[#allocation7 + $0x5d0] sm:$0xff]
    %v780 = vld [vmem:[#allocation7 + $0x5d8] sm:$0xff]
    %v781 = vld [vmem:[#allocation7 + $0x5e0] sm:$0xff]
    %v782 = vld [vmem:[#allocation7 + $0x5e8] sm:$0xff]
    %v783 = vld [vmem:[#allocation7 + $0x5f0] sm:$0xff]
    %v784 = vld [vmem:[#allocation7 + $0x5f8] sm:$0xff]
    %v785 = vld [vmem:[#allocation7 + $0x600] sm:$0xff]
    %v786 = vld [vmem:[#allocation7 + $0x608] sm:$0xff]
    %v787 = vld [vmem:[#allocation7 + $0x610] sm:$0xff]
    %v788 = vld [vmem:[#allocation7 + $0x618] sm:$0xff]
    %v789 = vld [vmem:[#allocation7 + $0x620] sm:$0xff]
    %v790 = vld [vmem:[#allocation7 + $0x628] sm:$0xff]
    %v791 = vld [vmem:[#allocation7 + $0x630] sm:$0xff]
    %v792 = vld [vmem:[#allocation7 + $0x638] sm:$0xff]
    %v793 = vld [vmem:[%s8] sm:$0xff]
    %v795 = vlaneseq
    %v796 = vshrl.u32 %v795, 7
    %v797 = vsub.s32 0, %v796
    %v798 = vrot.slane %v793, %v797
    %v799 = vlaneseq
    %v800 = vshrl.u32 %v799, 7
    %v801 = vsub.s32 1, %v800
    %v802 = vrot.slane %v793, %v801
    %v803 = vlaneseq
    %v804 = vshrl.u32 %v803, 7
    %v805 = vsub.s32 2, %v804
    %v806 = vrot.slane %v793, %v805
    %v807 = vlaneseq
    %v808 = vshrl.u32 %v807, 7
    %v809 = vsub.s32 3, %v808
    %v810 = vrot.slane %v793, %v809
    %v811 = vlaneseq
    %v812 = vshrl.u32 %v811, 7
    %v813 = vsub.s32 4, %v812
    %v814 = vrot.slane %v793, %v813
    %v815 = vlaneseq
    %v816 = vshrl.u32 %v815, 7
    %v817 = vsub.s32 5, %v816
    %v818 = vrot.slane %v793, %v817
    %v819 = vlaneseq
    %v820 = vshrl.u32 %v819, 7
    %v821 = vsub.s32 6, %v820
    %v822 = vrot.slane %v793, %v821
    %v823 = vlaneseq
    %v824 = vshrl.u32 %v823, 7
    %v825 = vsub.s32 7, %v824
    %v826 = vrot.slane %v793, %v825
    %v836 = vsel %vm378, %v592, 0
    %838 = vmatprep.subr.mxu0 %v714
    %839 = vmatpush1.msra.mxu0 %v713
    %840 = vmatprep.subr.mxu0 %v706
    %841 = vmatpush1.msra.mxu0 %v705
    %842 = vmatprep.subr.mxu0 %v698
    %843 = vmatpush1.msra.mxu0 %v697
    %844 = vmatprep.subr.mxu0 %v690
    %845 = vmatpush1.msra.mxu0 %v689
    %846 = vmatprep.subr.mxu0 %v682
    %847 = vmatpush1.msra.mxu0 %v681
    %848 = vmatprep.subr.mxu0 %v674
    %849 = vmatpush1.msra.mxu0 %v673
    %850 = vmatprep.subr.mxu0 %v666
    %851 = vmatpush1.msra.mxu0 %v665
    %852 = vmatprep.subr.mxu0 %v658
    %853 = vmatpush1.msra.mxu0 %v657
    %854 = vmatprep.subr.mxu0 %v650
    %855 = vmatpush1.msra.mxu0 %v649
    %856 = vmatprep.subr.mxu0 %v642
    %857 = vmatpush1.msra.mxu0 %v641
    %858 = vmatprep.subr.mxu0 %v634
    %859 = vmatpush1.msra.mxu0 %v633
    %860 = vmatprep.subr.mxu0 %v626
    %861 = vmatpush1.msra.mxu0 %v625
    %862 = vmatprep.subr.mxu0 %v618
    %863 = vmatpush1.msra.mxu0 %v617
    %864 = vmatprep.subr.mxu0 %v610
    %865 = vmatpush1.msra.mxu0 %v609
    %866 = vmatprep.subr.mxu0 %v602
    %867 = vmatpush1.msra.mxu0 %v601
    %868 = vmatprep.subr.mxu0 %v594
    %869 = vmatpush1.msra.mxu0 %v593
    %870 = vmatprep.subr.mxu0 0.0
    %871 = vmatpush2.msra.mxu0 0.0
    %872 = vmatprep.subr.mxu0 0.0
    %873 = vmatpush2.msra.mxu0 0.0
    %874 = vmatprep.subr.mxu0 0.0
    %875 = vmatpush2.msra.mxu0 0.0
    %876 = vmatprep.subr.mxu0 0.0
    %877 = vmatpush2.msra.mxu0 0.0
    %878 = vmatprep.subr.mxu0 0.0
    %879 = vmatpush2.msra.mxu0 0.0
    %880 = vmatprep.subr.mxu0 0.0
    %881 = vmatpush2.msra.mxu0 0.0
    %882 = vmatprep.subr.mxu0 0.0
    %883 = vmatpush2.msra.mxu0 0.0
    %884 = vmatprep.subr.mxu0 %v786
    %885 = vmatpush2.msra.mxu0 %v785
    %886 = vmatprep.subr.mxu0 %v778
    %887 = vmatpush2.msra.mxu0 %v777
    %888 = vmatprep.subr.mxu0 %v770
    %889 = vmatpush2.msra.mxu0 %v769
    %890 = vmatprep.subr.mxu0 %v762
    %891 = vmatpush2.msra.mxu0 %v761
    %892 = vmatprep.subr.mxu0 %v754
    %893 = vmatpush2.msra.mxu0 %v753
    %894 = vmatprep.subr.mxu0 %v746
    %895 = vmatpush2.msra.mxu0 %v745
    %896 = vmatprep.subr.mxu0 %v738
    %897 = vmatpush2.msra.mxu0 %v737
    %898 = vmatprep.subr.mxu0 %v730
    %899 = vmatpush2.msra.mxu0 %v729
    %900 = vmatprep.subr.mxu0 %v722
    %901 = vmatpush2.msra.mxu0 %v721
    %902 = vmatprep.mubr.f32.mxu0 %v836
    %903 = vmatmul.mubr.f32.gmra.mxu0 %v591
    %v904 = vpop.f32.mrf.mxu0
    %v905 = vadd.f32 %v798, %v904
    %v906 = vpop.f32.mrf.mxu0
    %v907 = vadd.f32 %v802, %v906
    %908 = vdwg.mxu0
    %909 = vmatprep.subr.mxu0 %v716
    %910 = vmatpush1.msra.mxu0 %v715
    %911 = vmatprep.subr.mxu0 %v708
    %912 = vmatpush1.msra.mxu0 %v707
    %913 = vmatprep.subr.mxu0 %v700
    %914 = vmatpush1.msra.mxu0 %v699
    %915 = vmatprep.subr.mxu0 %v692
    %916 = vmatpush1.msra.mxu0 %v691
    %917 = vmatprep.subr.mxu0 %v684
    %918 = vmatpush1.msra.mxu0 %v683
    %919 = vmatprep.subr.mxu0 %v676
    %920 = vmatpush1.msra.mxu0 %v675
    %921 = vmatprep.subr.mxu0 %v668
    %922 = vmatpush1.msra.mxu0 %v667
    %923 = vmatprep.subr.mxu0 %v660
    %924 = vmatpush1.msra.mxu0 %v659
    %925 = vmatprep.subr.mxu0 %v652
    %926 = vmatpush1.msra.mxu0 %v651
    %927 = vmatprep.subr.mxu0 %v644
    %928 = vmatpush1.msra.mxu0 %v643
    %929 = vmatprep.subr.mxu0 %v636
    %930 = vmatpush1.msra.mxu0 %v635
    %931 = vmatprep.subr.mxu0 %v628
    %932 = vmatpush1.msra.mxu0 %v627
    %933 = vmatprep.subr.mxu0 %v620
    %934 = vmatpush1.msra.mxu0 %v619
    %935 = vmatprep.subr.mxu0 %v612
    %936 = vmatpush1.msra.mxu0 %v611
    %937 = vmatprep.subr.mxu0 %v604
    %938 = vmatpush1.msra.mxu0 %v603
    %939 = vmatprep.subr.mxu0 %v596
    %940 = vmatpush1.msra.mxu0 %v595
    %941 = vmatprep.subr.mxu0 0.0
    %942 = vmatpush2.msra.mxu0 0.0
    %943 = vmatprep.subr.mxu0 0.0
    %944 = vmatpush2.msra.mxu0 0.0
    %945 = vmatprep.subr.mxu0 0.0
    %946 = vmatpush2.msra.mxu0 0.0
    %947 = vmatprep.subr.mxu0 0.0
    %948 = vmatpush2.msra.mxu0 0.0
    %949 = vmatprep.subr.mxu0 0.0
    %950 = vmatpush2.msra.mxu0 0.0
    %951 = vmatprep.subr.mxu0 0.0
    %952 = vmatpush2.msra.mxu0 0.0
    %953 = vmatprep.subr.mxu0 0.0
    %954 = vmatpush2.msra.mxu0 0.0
    %955 = vmatprep.subr.mxu0 %v788
    %956 = vmatpush2.msra.mxu0 %v787
    %957 = vmatprep.subr.mxu0 %v780
    %958 = vmatpush2.msra.mxu0 %v779
    %959 = vmatprep.subr.mxu0 %v772
    %960 = vmatpush2.msra.mxu0 %v771
    %961 = vmatprep.subr.mxu0 %v764
    %962 = vmatpush2.msra.mxu0 %v763
    %963 = vmatprep.subr.mxu0 %v756
    %964 = vmatpush2.msra.mxu0 %v755
    %965 = vmatprep.subr.mxu0 %v748
    %966 = vmatpush2.msra.mxu0 %v747
    %967 = vmatprep.subr.mxu0 %v740
    %968 = vmatpush2.msra.mxu0 %v739
    %969 = vmatprep.subr.mxu0 %v732
    %970 = vmatpush2.msra.mxu0 %v731
    %971 = vmatprep.subr.mxu0 %v724
    %972 = vmatpush2.msra.mxu0 %v723
    %973 = vmatprep.mubr.f32.mxu0 %v836
    %974 = vmatmul.mubr.f32.gmra.mxu0 %v591
    %v975 = vpop.f32.mrf.mxu0
    %v976 = vadd.f32 %v806, %v975
    %v977 = vpop.f32.mrf.mxu0
    %v978 = vadd.f32 %v810, %v977
    %979 = vdwg.mxu0
    %980 = vmatprep.subr.mxu0 %v718
    %981 = vmatpush1.msra.mxu0 %v717
    %982 = vmatprep.subr.mxu0 %v710
    %983 = vmatpush1.msra.mxu0 %v709
    %984 = vmatprep.subr.mxu0 %v702
    %985 = vmatpush1.msra.mxu0 %v701
    %986 = vmatprep.subr.mxu0 %v694
    %987 = vmatpush1.msra.mxu0 %v693
    %988 = vmatprep.subr.mxu0 %v686
    %989 = vmatpush1.msra.mxu0 %v685
    %990 = vmatprep.subr.mxu0 %v678
    %991 = vmatpush1.msra.mxu0 %v677
    %992 = vmatprep.subr.mxu0 %v670
    %993 = vmatpush1.msra.mxu0 %v669
    %994 = vmatprep.subr.mxu0 %v662
    %995 = vmatpush1.msra.mxu0 %v661
    %996 = vmatprep.subr.mxu0 %v654
    %997 = vmatpush1.msra.mxu0 %v653
    %998 = vmatprep.subr.mxu0 %v646
    %999 = vmatpush1.msra.mxu0 %v645
    %1000 = vmatprep.subr.mxu0 %v638
    %1001 = vmatpush1.msra.mxu0 %v637
    %1002 = vmatprep.subr.mxu0 %v630
    %1003 = vmatpush1.msra.mxu0 %v629
    %1004 = vmatprep.subr.mxu0 %v622
    %1005 = vmatpush1.msra.mxu0 %v621
    %1006 = vmatprep.subr.mxu0 %v614
    %1007 = vmatpush1.msra.mxu0 %v613
    %1008 = vmatprep.subr.mxu0 %v606
    %1009 = vmatpush1.msra.mxu0 %v605
    %1010 = vmatprep.subr.mxu0 %v598
    %1011 = vmatpush1.msra.mxu0 %v597
    %1012 = vmatprep.subr.mxu0 0.0
    %1013 = vmatpush2.msra.mxu0 0.0
    %1014 = vmatprep.subr.mxu0 0.0
    %1015 = vmatpush2.msra.mxu0 0.0
    %1016 = vmatprep.subr.mxu0 0.0
    %1017 = vmatpush2.msra.mxu0 0.0
    %1018 = vmatprep.subr.mxu0 0.0
    %1019 = vmatpush2.msra.mxu0 0.0
    %1020 = vmatprep.subr.mxu0 0.0
    %1021 = vmatpush2.msra.mxu0 0.0
    %1022 = vmatprep.subr.mxu0 0.0
    %1023 = vmatpush2.msra.mxu0 0.0
    %1024 = vmatprep.subr.mxu0 0.0
    %1025 = vmatpush2.msra.mxu0 0.0
    %1026 = vmatprep.subr.mxu0 %v790
    %1027 = vmatpush2.msra.mxu0 %v789
    %1028 = vmatprep.subr.mxu0 %v782
    %1029 = vmatpush2.msra.mxu0 %v781
    %1030 = vmatprep.subr.mxu0 %v774
    %1031 = vmatpush2.msra.mxu0 %v773
    %1032 = vmatprep.subr.mxu0 %v766
    %1033 = vmatpush2.msra.mxu0 %v765
    %1034 = vmatprep.subr.mxu0 %v758
    %1035 = vmatpush2.msra.mxu0 %v757
    %1036 = vmatprep.subr.mxu0 %v750
    %1037 = vmatpush2.msra.mxu0 %v749
    %1038 = vmatprep.subr.mxu0 %v742
    %1039 = vmatpush2.msra.mxu0 %v741
    %1040 = vmatprep.subr.mxu0 %v734
    %1041 = vmatpush2.msra.mxu0 %v733
    %1042 = vmatprep.subr.mxu0 %v726
    %1043 = vmatpush2.msra.mxu0 %v725
    %1044 = vmatprep.mubr.f32.mxu0 %v836
    %1045 = vmatmul.mubr.f32.gmra.mxu0 %v591
    %v1046 = vpop.f32.mrf.mxu0
    %v1047 = vadd.f32 %v814, %v1046
    %v1048 = vpop.f32.mrf.mxu0
    %v1049 = vadd.f32 %v818, %v1048
    %1050 = vdwg.mxu0
    %1051 = vmatprep.subr.mxu0 %v720
    %1052 = vmatpush1.msra.mxu0 %v719
    %1053 = vmatprep.subr.mxu0 %v712
    %1054 = vmatpush1.msra.mxu0 %v711
    %1055 = vmatprep.subr.mxu0 %v704
    %1056 = vmatpush1.msra.mxu0 %v703
    %1057 = vmatprep.subr.mxu0 %v696
    %1058 = vmatpush1.msra.mxu0 %v695
    %1059 = vmatprep.subr.mxu0 %v688
    %1060 = vmatpush1.msra.mxu0 %v687
    %1061 = vmatprep.subr.mxu0 %v680
    %1062 = vmatpush1.msra.mxu0 %v679
    %1063 = vmatprep.subr.mxu0 %v672
    %1064 = vmatpush1.msra.mxu0 %v671
    %1065 = vmatprep.subr.mxu0 %v664
    %1066 = vmatpush1.msra.mxu0 %v663
    %1067 = vmatprep.subr.mxu0 %v656
    %1068 = vmatpush1.msra.mxu0 %v655
    %1069 = vmatprep.subr.mxu0 %v648
    %1070 = vmatpush1.msra.mxu0 %v647
    %1071 = vmatprep.subr.mxu0 %v640
    %1072 = vmatpush1.msra.mxu0 %v639
    %1073 = vmatprep.subr.mxu0 %v632
    %1074 = vmatpush1.msra.mxu0 %v631
    %1075 = vmatprep.subr.mxu0 %v624
    %1076 = vmatpush1.msra.mxu0 %v623
    %1077 = vmatprep.subr.mxu0 %v616
    %1078 = vmatpush1.msra.mxu0 %v615
    %1079 = vmatprep.subr.mxu0 %v608
    %1080 = vmatpush1.msra.mxu0 %v607
    %1081 = vmatprep.subr.mxu0 %v600
    %1082 = vmatpush1.msra.mxu0 %v599
    %1083 = vmatprep.subr.mxu0 0.0
    %1084 = vmatpush2.msra.mxu0 0.0
    %1085 = vmatprep.subr.mxu0 0.0
    %1086 = vmatpush2.msra.mxu0 0.0
    %1087 = vmatprep.subr.mxu0 0.0
    %1088 = vmatpush2.msra.mxu0 0.0
    %1089 = vmatprep.subr.mxu0 0.0
    %1090 = vmatpush2.msra.mxu0 0.0
    %1091 = vmatprep.subr.mxu0 0.0
    %1092 = vmatpush2.msra.mxu0 0.0
    %1093 = vmatprep.subr.mxu0 0.0
    %1094 = vmatpush2.msra.mxu0 0.0
    %1095 = vmatprep.subr.mxu0 0.0
    %1096 = vmatpush2.msra.mxu0 0.0
    %1097 = vmatprep.subr.mxu0 %v792
    %1098 = vmatpush2.msra.mxu0 %v791
    %1099 = vmatprep.subr.mxu0 %v784
    %1100 = vmatpush2.msra.mxu0 %v783
    %1101 = vmatprep.subr.mxu0 %v776
    %1102 = vmatpush2.msra.mxu0 %v775
    %1103 = vmatprep.subr.mxu0 %v768
    %1104 = vmatpush2.msra.mxu0 %v767
    %1105 = vmatprep.subr.mxu0 %v760
    %1106 = vmatpush2.msra.mxu0 %v759
    %1107 = vmatprep.subr.mxu0 %v752
    %1108 = vmatpush2.msra.mxu0 %v751
    %1109 = vmatprep.subr.mxu0 %v744
    %1110 = vmatpush2.msra.mxu0 %v743
    %1111 = vmatprep.subr.mxu0 %v736
    %1112 = vmatpush2.msra.mxu0 %v735
    %1113 = vmatprep.subr.mxu0 %v728
    %1114 = vmatpush2.msra.mxu0 %v727
    %1115 = vmatprep.mubr.f32.mxu0 %v836
    %1116 = vmatmul.mubr.f32.gmra.mxu0 %v591
    %v1117 = vpop.f32.mrf.mxu0
    %v1118 = vadd.f32 %v822, %v1117
    %v1119 = vpop.f32.mrf.mxu0
    %v1120 = vadd.f32 %v826, %v1119
    %1121 = vdwg.mxu0
    %v1122 = vmax.f32 %v905, 0.0
    %v1123 = vmax.f32 %v907, 0.0
    %v1124 = vmax.f32 %v976, 0.0
    %v1125 = vmax.f32 %v978, 0.0
    %v1126 = vmax.f32 %v1047, 0.0
    %v1127 = vmax.f32 %v1049, 0.0
    %v1128 = vmax.f32 %v1118, 0.0
    %v1129 = vmax.f32 %v1120, 0.0
    %v1130 = vcombine.low %v1122, %v1124
    %v1132 = vunpack.c.l.s4 1983009808
    %v1133 = vunpack.c.0.s8 %v1132
    %v1134 = vlaneseq
    %v1135 = vshrl.u32 %v1134, 7
    %v1136 = vsub.s32 %v1133, %v1135
    %v1137 = vrot.slane %v1130, %v1136
    %v1138 = vcombine.low %v1123, %v1125
    %v1140 = vunpack.c.l.s4 1983009808
    %v1141 = vunpack.c.0.s8 %v1140
    %v1142 = vlaneseq
    %v1143 = vshrl.u32 %v1142, 7
    %v1144 = vsub.s32 %v1141, %v1143
    %v1145 = vrot.slane %v1138, %v1144
    %v1146 = vcombine.low %v1126, %v1128
    %v1148 = vunpack.c.l.s4 1983009808
    %v1149 = vunpack.c.0.s8 %v1148
    %v1150 = vlaneseq
    %v1151 = vshrl.u32 %v1150, 7
    %v1152 = vsub.s32 %v1149, %v1151
    %v1153 = vrot.slane %v1146, %v1152
    %v1154 = vcombine.low %v1127, %v1129
    %v1156 = vunpack.c.l.s4 1983009808
    %v1157 = vunpack.c.0.s8 %v1156
    %v1158 = vlaneseq
    %v1159 = vshrl.u32 %v1158, 7
    %v1160 = vsub.s32 %v1157, %v1159
    %v1161 = vrot.slane %v1154, %v1160
    %v1162 = vcombine.low %v1137, %v1145
    %v1163 = vcombine.high %v1137, %v1145
    %v1165 = vunpack.c.l.s4 1934713408
    %v1166 = vunpack.c.0.s8 %v1165
    %v1167 = vlaneseq
    %v1168 = vshrl.u32 %v1167, 7
    %v1169 = vsub.s32 %v1166, %v1168
    %v1170 = vrot.slane %v1162, %v1169
    %v1172 = vunpack.c.l.s4 1934713408
    %v1173 = vunpack.c.0.s8 %v1172
    %v1174 = vlaneseq
    %v1175 = vshrl.u32 %v1174, 7
    %v1176 = vsub.s32 %v1173, %v1175
    %v1177 = vrot.slane %v1163, %v1176
    %v1178 = vcombine.low %v1153, %v1161
    %v1179 = vcombine.high %v1153, %v1161
    %v1181 = vunpack.c.l.s4 1934713408
    %v1182 = vunpack.c.0.s8 %v1181
    %v1183 = vlaneseq
    %v1184 = vshrl.u32 %v1183, 7
    %v1185 = vsub.s32 %v1182, %v1184
    %v1186 = vrot.slane %v1178, %v1185
    %v1188 = vunpack.c.l.s4 1934713408
    %v1189 = vunpack.c.0.s8 %v1188
    %v1190 = vlaneseq
    %v1191 = vshrl.u32 %v1190, 7
    %v1192 = vsub.s32 %v1189, %v1191
    %v1193 = vrot.slane %v1179, %v1192
    %v1194 = vcombine.low %v1170, %v1186
    %v1195 = vcombine.high %v1170, %v1186
    %v1196 = vcombine.low %v1177, %v1193
    %v1197 = vcombine.high %v1177, %v1193
    %v1198 = vlaneseq
    %v1199 = vand.u32 %v1198, 127
    %vm1200 = vcmp.lt.s32.totalorder %v1199, 33
    %vm1201 = vcmp.ge.s32.totalorder %v1199, 33
    %vm1202 = vcmp.lt.s32.totalorder %v1199, 66
    %vm1203 = vmand %vm1201, %vm1202
    %vm1204 = vcmp.ge.s32.totalorder %v1199, 66
    %vm1205 = vcmp.lt.s32.totalorder %v1199, 106
    %vm1206 = vmand %vm1204, %vm1205
    %v1207 = vsel %vm1200, %v1194, -1e+30
    %v1208 = vsel %vm1200, %v1195, -1e+30
    %v1209 = vsel %vm1200, %v1196, -1e+30
    %v1210 = vsel %vm1200, %v1197, -1e+30
    %1211 = vmax.xlane.f32.xlu0 %v1207
    %v1212 = vpop.xlane.xlu0 %1211
    %1213 = vmax.xlane.f32.xlu0 %v1208
    %v1214 = vpop.xlane.xlu0 %1213
    %1215 = vmax.xlane.f32.xlu0 %v1209
    %v1216 = vpop.xlane.xlu0 %1215
    %1217 = vmax.xlane.f32.xlu0 %v1210
    %v1218 = vpop.xlane.xlu0 %1217
    %v1219 = vsub.f32 %v1194, %v1212
    %v1220 = vsub.f32 %v1195, %v1214
    %v1221 = vsub.f32 %v1196, %v1216
    %v1222 = vsub.f32 %v1197, %v1218
    %v1223 = vsel %vm1200, %v1219, -1e+30
    %v1224 = vsel %vm1200, %v1220, -1e+30
    %v1225 = vsel %vm1200, %v1221, -1e+30
    %v1226 = vsel %vm1200, %v1222, -1e+30
    %v1227 = vmul.f32 %v1223, 1.442695
    %v1228 = vpow.pop %v1227
    %v1229 = vmul.f32 %v1224, 1.442695
    %v1230 = vpow.pop %v1229
    %v1231 = vmul.f32 %v1225, 1.442695
    %v1232 = vpow.pop %v1231
    %v1233 = vmul.f32 %v1226, 1.442695
    %v1234 = vpow.pop %v1233
    %1235 = vadd.xlane.f32.xlu0 %v1228
    %v1236 = vpop.xlane.xlu0 %1235
    %1237 = vadd.xlane.f32.xlu0 %v1230
    %v1238 = vpop.xlane.xlu0 %1237
    %1239 = vadd.xlane.f32.xlu0 %v1232
    %v1240 = vpop.xlane.xlu0 %1239
    %1241 = vadd.xlane.f32.xlu0 %v1234
    %v1242 = vpop.xlane.xlu0 %1241
    %v1243 = vlog2.pop %v1236
    %v1244 = vmul.f32 %v1243, 0.6931472
    %v1245 = vlog2.pop %v1238
    %v1246 = vmul.f32 %v1245, 0.6931472
    %v1247 = vlog2.pop %v1240
    %v1248 = vmul.f32 %v1247, 0.6931472
    %v1249 = vlog2.pop %v1242
    %v1250 = vmul.f32 %v1249, 0.6931472
    %v1251 = vadd.f32 %v1212, %v1244
    %v1252 = vadd.f32 %v1214, %v1246
    %v1253 = vadd.f32 %v1216, %v1248
    %v1254 = vadd.f32 %v1218, %v1250
    %v1255 = vsel %vm1203, %v1194, -1e+30
    %v1256 = vsel %vm1203, %v1195, -1e+30
    %v1257 = vsel %vm1203, %v1196, -1e+30
    %v1258 = vsel %vm1203, %v1197, -1e+30
    %1259 = vmax.xlane.f32.xlu0 %v1255
    %v1260 = vpop.xlane.xlu0 %1259
    %1261 = vmax.xlane.f32.xlu0 %v1256
    %v1262 = vpop.xlane.xlu0 %1261
    %1263 = vmax.xlane.f32.xlu0 %v1257
    %v1264 = vpop.xlane.xlu0 %1263
    %1265 = vmax.xlane.f32.xlu0 %v1258
    %v1266 = vpop.xlane.xlu0 %1265
    %v1267 = vsub.f32 %v1194, %v1260
    %v1268 = vsub.f32 %v1195, %v1262
    %v1269 = vsub.f32 %v1196, %v1264
    %v1270 = vsub.f32 %v1197, %v1266
    %v1271 = vsel %vm1203, %v1267, -1e+30
    %v1272 = vsel %vm1203, %v1268, -1e+30
    %v1273 = vsel %vm1203, %v1269, -1e+30
    %v1274 = vsel %vm1203, %v1270, -1e+30
    %v1275 = vmul.f32 %v1271, 1.442695
    %v1276 = vpow.pop %v1275
    %v1277 = vmul.f32 %v1272, 1.442695
    %v1278 = vpow.pop %v1277
    %v1279 = vmul.f32 %v1273, 1.442695
    %v1280 = vpow.pop %v1279
    %v1281 = vmul.f32 %v1274, 1.442695
    %v1282 = vpow.pop %v1281
    %1283 = vadd.xlane.f32.xlu0 %v1276
    %v1284 = vpop.xlane.xlu0 %1283
    %1285 = vadd.xlane.f32.xlu0 %v1278
    %v1286 = vpop.xlane.xlu0 %1285
    %1287 = vadd.xlane.f32.xlu0 %v1280
    %v1288 = vpop.xlane.xlu0 %1287
    %1289 = vadd.xlane.f32.xlu0 %v1282
    %v1290 = vpop.xlane.xlu0 %1289
    %v1291 = vlog2.pop %v1284
    %v1292 = vmul.f32 %v1291, 0.6931472
    %v1293 = vlog2.pop %v1286
    %v1294 = vmul.f32 %v1293, 0.6931472
    %v1295 = vlog2.pop %v1288
    %v1296 = vmul.f32 %v1295, 0.6931472
    %v1297 = vlog2.pop %v1290
    %v1298 = vmul.f32 %v1297, 0.6931472
    %v1299 = vadd.f32 %v1260, %v1292
    %v1300 = vadd.f32 %v1262, %v1294
    %v1301 = vadd.f32 %v1264, %v1296
    %v1302 = vadd.f32 %v1266, %v1298
    %v1303 = vsel %vm1206, %v1194, -1e+30
    %v1304 = vsel %vm1206, %v1195, -1e+30
    %v1305 = vsel %vm1206, %v1196, -1e+30
    %v1306 = vsel %vm1206, %v1197, -1e+30
    %1307 = vmax.xlane.f32.xlu0 %v1303
    %v1308 = vpop.xlane.xlu0 %1307
    %1309 = vmax.xlane.f32.xlu0 %v1304
    %v1310 = vpop.xlane.xlu0 %1309
    %1311 = vmax.xlane.f32.xlu0 %v1305
    %v1312 = vpop.xlane.xlu0 %1311
    %1313 = vmax.xlane.f32.xlu0 %v1306
    %v1314 = vpop.xlane.xlu0 %1313
    %v1315 = vsub.f32 %v1194, %v1308
    %v1316 = vsub.f32 %v1195, %v1310
    %v1317 = vsub.f32 %v1196, %v1312
    %v1318 = vsub.f32 %v1197, %v1314
    %v1319 = vsel %vm1206, %v1315, -1e+30
    %v1320 = vsel %vm1206, %v1316, -1e+30
    %v1321 = vsel %vm1206, %v1317, -1e+30
    %v1322 = vsel %vm1206, %v1318, -1e+30
    %v1323 = vmul.f32 %v1319, 1.442695
    %v1324 = vpow.pop %v1323
    %v1325 = vmul.f32 %v1320, 1.442695
    %v1326 = vpow.pop %v1325
    %v1327 = vmul.f32 %v1321, 1.442695
    %v1328 = vpow.pop %v1327
    %v1329 = vmul.f32 %v1322, 1.442695
    %v1330 = vpow.pop %v1329
    %1331 = vadd.xlane.f32.xlu0 %v1324
    %v1332 = vpop.xlane.xlu0 %1331
    %1333 = vadd.xlane.f32.xlu0 %v1326
    %v1334 = vpop.xlane.xlu0 %1333
    %1335 = vadd.xlane.f32.xlu0 %v1328
    %v1336 = vpop.xlane.xlu0 %1335
    %1337 = vadd.xlane.f32.xlu0 %v1330
    %v1338 = vpop.xlane.xlu0 %1337
    %v1339 = vlog2.pop %v1332
    %v1340 = vmul.f32 %v1339, 0.6931472
    %v1341 = vlog2.pop %v1334
    %v1342 = vmul.f32 %v1341, 0.6931472
    %v1343 = vlog2.pop %v1336
    %v1344 = vmul.f32 %v1343, 0.6931472
    %v1345 = vlog2.pop %v1338
    %v1346 = vmul.f32 %v1345, 0.6931472
    %v1347 = vadd.f32 %v1308, %v1340
    %v1348 = vadd.f32 %v1310, %v1342
    %v1349 = vadd.f32 %v1312, %v1344
    %v1350 = vadd.f32 %v1314, %v1346
    %v1351 = vsel %vm1203, %v1299, %v1347
    %v1352 = vsel %vm1203, %v1300, %v1348
    %v1353 = vsel %vm1203, %v1301, %v1349
    %v1354 = vsel %vm1203, %v1302, %v1350
    %v1355 = vsel %vm1200, %v1251, %v1351
    %v1356 = vsel %vm1200, %v1252, %v1352
    %v1357 = vsel %vm1200, %v1253, %v1353
    %v1358 = vsel %vm1200, %v1254, %v1354
    %v1359 = vsub.f32 %v1194, %v1355
    %v1360 = vsub.f32 %v1195, %v1356
    %v1361 = vsub.f32 %v1196, %v1357
    %v1362 = vsub.f32 %v1197, %v1358
    %1363 = vst [vmem:[%s9] sm:$0xff] %v1359
    %1364 = vst [vmem:[%s9 + $0x8] sm:$0xff] %v1360
    %1365 = vst [vmem:[%s9 + $0x10] sm:$0xff] %v1361
    %1366 = vst [vmem:[%s9 + $0x18] sm:$0xff] %v1362
    // Predicated region
    $region54: #{harmonizer_forward.1} parent=1 // pred_check
      _
    $region55: #{harmonizer_forward.1} parent=1 // pred_check_branch
      %1368 = sbr.rel (0) target = $region57
    $region56: #{harmonizer_forward.1} parent=1 // pred_region
      _
    $region57: #{harmonizer_forward.1} parent=1 // pred_fallthru
      _
    // Predicated region
    $region58: #{harmonizer_forward.1} parent=1 // pred_check
      _
    $region59: #{harmonizer_forward.1} parent=1 // pred_check_branch
      %1370 = sbr.rel (0) target = $region61
    $region60: #{harmonizer_forward.1} parent=1 // pred_region
      _
    $region61: #{harmonizer_forward.1} parent=1 // pred_fallthru
      _
    %1371 = vsyncpa [#allocation3], 1
    %1372 = vsyncpa [#allocation5], 1
    %1373 = vsyncpa [#allocation8], 1

</llo_original>
